<compile_context>
chip_gen: v6e
topology: v6e:2x2x1
jax: 0.10.0
libtpu: 0.0.40
codegen_flags: <defaults>
</compile_context>

<pallas_src>
import functools

import jax
import jax.numpy as jnp
import numpy as np
from jax.experimental import pallas as pl
from jax.experimental.pallas import tpu as pltpu

NEG_SLOPE = 0.01   # nn.LeakyReLU default
BN_EPS = 1e-5      # nn.BatchNorm2d default


def _leaky(v):
    return jnp.where(v >= 0, v, NEG_SLOPE * v)


# ----------------------------------------------------------------------------
# In-kernel helpers
# ----------------------------------------------------------------------------

def _channel_allsum(v, C, LW):
    """Per-channel sum across lanes (channel = lane % C), broadcast back to
    every lane of that channel.  log2(LW/C) XLU lane rotations + adds."""
    s = v
    shift = C
    while shift < LW:
        s = s + pltpu.roll(s, shift, axis=1)
        shift *= 2
    return s


def _conv3x3(pad_ref, w_ref, b_ref, H):
    """3x3 SAME conv of all packed images via 3 row-tap matmuls.

    pad_ref: (H+2, PK) bf16 scratch, zero halo, interior already written.
    w_ref:   (3, PK, LW) bf16 block-diagonal block-Toeplitz row-tap weights.
    b_ref:   (1, LW) f32 lane-tiled bias.
    returns: (H, LW) f32.
    """
    acc = None
    for dy in range(3):
        rows = pad_ref[dy:dy + H, :]                         # bf16, no re-cast
        part = jax.lax.dot_general(
            rows, w_ref[dy],
            dimension_numbers=(((1,), (0,)), ((), ())),
            preferred_element_type=jnp.float32)              # (H, LW) f32
        acc = part if acc is None else acc + part
    return acc + b_ref[...]


def _bn(y, g_row, b_row, C, LW, count):
    """Training-mode BatchNorm2d over the whole (resident) batch.
    Two-pass mean/var in f32, biased variance, fused scale+shift."""
    inv_cnt = 1.0 / count
    mean = _channel_allsum(jnp.sum(y, axis=0, keepdims=True), C, LW) * inv_cnt
    cen = y - mean
    var = _channel_allsum(jnp.sum(cen * cen, axis=0, keepdims=True), C, LW) * inv_cnt
    scale = g_row * jax.lax.rsqrt(var + BN_EPS)
    return cen * scale + b_row


# ----------------------------------------------------------------------------
# Fused kernel
# ----------------------------------------------------------------------------

def _convblock_kernel(x_ref, w1_ref, b1_ref, g1_ref, be1_ref,
                      w2_ref, b2_ref, g2_ref, be2_ref,
                      o_ref, pad_ref, *, H, C, LW, count):
    # Zero the scratch once: halo rows 0 / H+1 and the per-image halo columns
    # (lanes >= LW) stay zero; interior rows [1,H] x lanes [0,LW) are fully
    # overwritten below, so this never needs repeating.
    pad_ref[...] = jnp.zeros_like(pad_ref)

    x = x_ref[...]                                           # (H, LW) f32 (residual)

    # conv1 + bias (bf16 MXU operands, f32 accumulation)
    pad_ref[1:H + 1, 0:LW] = x.astype(jnp.bfloat16)          # single cast
    y1 = _conv3x3(pad_ref, w1_ref, b1_ref, H)

    # BN1 + LeakyReLU
    h = _leaky(_bn(y1, g1_ref[...], be1_ref[...], C, LW, count))

    # conv2 + bias
    pad_ref[1:H + 1, 0:LW] = h.astype(jnp.bfloat16)
    y2 = _conv3x3(pad_ref, w2_ref, b2_ref, H)

    # BN2 + residual + LeakyReLU  (full 128-lane dense store)
    o_ref[...] = _leaky(_bn(y2, g2_ref[...], be2_ref[...], C, LW, count) + x)


# ----------------------------------------------------------------------------
# Wrapper
# ----------------------------------------------------------------------------

def _toeplitz_taps(w_hwio, N, W):
    """(3,3,C,C) HWIO conv weight -> (3, PK, LW) bf16 block-diagonal row-tap
    matrices for the packed-lane layout.

    Source-lane space (PK = (N*W + 2*N)*C): lanes [0, N*W*C) hold both images'
    interiors (image n at offset n*W*C); the trailing 2*N*C lanes are per-image
    zero halo columns (left/right SAME padding) that are never written.
    """
    C = w_hwio.shape[-2]
    n_src = N * W + 2 * N
    taps = []
    for dy in range(3):
        t = jnp.zeros((n_src * C, N * W * C), jnp.float32)
        for dx in range(3):
            sel = np.zeros((n_src, N * W), np.float32)
            for n in range(N):
                for w in range(W):
                    q = w + dx - 1
                    if 0 <= q < W:
                        s = n * W + q
                    else:                                   # maps to a zero halo slot
                        s = N * W + 2 * n + (0 if q < 0 else 1)
                    sel[s, n * W + w] = 1.0
            # kron: rows = src_slot*C + c_in, cols = dst_slot*C + c_out
            t = t + jnp.kron(jnp.asarray(sel), w_hwio[dy, dx].astype(jnp.float32))
        taps.append(t)
    return jnp.stack(taps).astype(jnp.bfloat16)


def conv_block_forward(x_nchw, params):
    """Pallas forward of ConvBlock. x_nchw: (N, C, H, W) float32."""
    (w1, b1, g1, be1, w2, b2, g2, be2) = params
    N, C, H, W = x_nchw.shape
    LW = N * W * C                     # packed lane width (128 for the test size)
    PK = LW + 2 * N * C                # padded lane width (+2 halo cols / image)
    assert LW % C == 0 and ((LW // C) & ((LW // C) - 1)) == 0, \
        "LW/C must be a power of two for the lane-rotation channel reduction"

    # Lane-dense packed layout: (H, N*W*C), lane = n*W*C + w*C + c.
    # TODO(synk): fold this relayout into the kernel load/store.
    x2d = jnp.transpose(x_nchw, (2, 0, 3, 1)).reshape(H, LW)

    w1_t = _toeplitz_taps(w1, N, W)
    w2_t = _toeplitz_taps(w2, N, W)

    def lane_tile(v):
        return jnp.tile(v.astype(jnp.float32), N * W).reshape(1, LW)

    b1_t, g1_t, be1_t = lane_tile(b1), lane_tile(g1), lane_tile(be1)
    b2_t, g2_t, be2_t = lane_tile(b2), lane_tile(g2), lane_tile(be2)

    img_spec = pl.BlockSpec((H, LW), lambda i: (0, 0))
    row_spec = pl.BlockSpec((1, LW), lambda i: (0, 0))
    wt_spec = pl.BlockSpec((3, PK, LW), lambda i: (0, 0, 0))

    out2d = pl.pallas_call(
        functools.partial(_convblock_kernel, H=H, C=C, LW=LW,
                          count=float(N * H * W)),
        grid=(1,),
        in_specs=[img_spec, wt_spec, row_spec, row_spec, row_spec,
                  wt_spec, row_spec, row_spec, row_spec],
        out_specs=img_spec,
        out_shape=jax.ShapeDtypeStruct((H, LW), jnp.float32),
        scratch_shapes=[pltpu.VMEM((H + 2, PK), jnp.bfloat16)],
        compiler_params=pltpu.CompilerParams(
            dimension_semantics=("arbitrary",),
            # actual per-step footprint is < 1 MiB; generous headroom, safe on
            # v5e / v6e / v7x scoped-VMEM limits.
            vmem_limit_bytes=8 * 1024 * 1024),
    )(x2d, w1_t, b1_t, g1_t, be1_t, w2_t, b2_t, g2_t, be2_t)

    out = out2d.reshape(H, N, W, C)
    return jnp.transpose(out, (1, 3, 0, 2))    # -> NCHW


# ----------------------------------------------------------------------------
# Pure-JAX reference (same numerics: bf16 conv operands, f32 accum, batch BN)
# ----------------------------------------------------------------------------

def _reference_forward(x_nchw, params):
    (w1, b1, g1, be1, w2, b2, g2, be2) = params
    x = jnp.transpose(x_nchw, (0, 2, 3, 1))

    def conv(a, w, b):
        y = jax.lax.conv_general_dilated(
            a.astype(jnp.bfloat16), w.astype(jnp.bfloat16),
            window_strides=(1, 1), padding="SAME",
            dimension_numbers=("NHWC", "HWIO", "NHWC"),
            preferred_element_type=jnp.float32)
        return y + b.reshape(1, 1, 1, -1)

    def bn(y, g, be):
        m = jnp.mean(y, axis=(0, 1, 2), keepdims=True)
        v = jnp.mean((y - m) ** 2, axis=(0, 1, 2), keepdims=True)
        return (y - m) * jax.lax.rsqrt(v + BN_EPS) * g.reshape(1, 1, 1, -1) \
            + be.reshape(1, 1, 1, -1)

    h = _leaky(bn(conv(x, w1, b1), g1, be1))
    h = bn(conv(h, w2, b2), g2, be2)
    out = _leaky(h + x)
    return jnp.transpose(out, (0, 3, 1, 2))


def init_params(key, c):
    """Deterministic init mirroring nn.Conv2d / nn.BatchNorm2d defaults."""
    ks = jax.random.split(key, 4)
    fan_in = c * 3 * 3
    bound = 1.0 / np.sqrt(fan_in)

    def conv_w(k):
        w_oihw = jax.random.uniform(k, (c, c, 3, 3), jnp.float32, -bound, bound)
        return jnp.transpose(w_oihw, (2, 3, 1, 0))  # (kh, kw, in, out) HWIO

    w1 = conv_w(ks[0])
    b1 = jax.random.uniform(ks[1], (c,), jnp.float32, -bound, bound)
    w2 = conv_w(ks[2])
    b2 = jax.random.uniform(ks[3], (c,), jnp.float32, -bound, bound)
    g1 = jnp.ones((c,), jnp.float32)
    be1 = jnp.zeros((c,), jnp.float32)
    g2 = jnp.ones((c,), jnp.float32)
    be2 = jnp.zeros((c,), jnp.float32)
    return (w1, b1, g1, be1, w2, b2, g2, be2)


if __name__ == "__main__":
    key = jax.random.PRNGKey(0)
    k_x, k_p = jax.random.split(key)

    N, C, H, W = 2, 4, 16, 16
    x = jax.random.normal(k_x, (N, C, H, W), jnp.float32)
    params = init_params(k_p, C)

    out = jax.jit(conv_block_forward)(x, params)
    out = jax.block_until_ready(out)

    ref = jax.block_until_ready(_reference_forward(x, params))
    assert out.shape == (N, C, H, W)
    # bf16 MXU operands (f32 accumulation) -> slightly looser tolerance.
    np.testing.assert_allclose(np.asarray(out), np.asarray(ref),
                               rtol=1e-2, atol=1e-2)
    print("KERNEL_OK")
</pallas_src>

<mosaic_0001>
module attributes {stable_mosaic.version = 11 : i64} {
  func.func @_convblock_kernel(%arg0: i32, %arg1: memref<16x128xf32, #tpu.memory_space<vmem>>, %arg2: memref<3x144x128xbf16, #tpu.memory_space<vmem>>, %arg3: memref<1x128xf32, #tpu.memory_space<vmem>>, %arg4: memref<1x128xf32, #tpu.memory_space<vmem>>, %arg5: memref<1x128xf32, #tpu.memory_space<vmem>>, %arg6: memref<3x144x128xbf16, #tpu.memory_space<vmem>>, %arg7: memref<1x128xf32, #tpu.memory_space<vmem>>, %arg8: memref<1x128xf32, #tpu.memory_space<vmem>>, %arg9: memref<1x128xf32, #tpu.memory_space<vmem>>, %arg10: memref<16x128xf32, #tpu.memory_space<vmem>>, %arg11: memref<18x144xbf16, #tpu.memory_space<vmem>>) attributes {dimension_semantics = [#tpu.dimension_semantics<arbitrary>], iteration_bounds = array<i64: 1>, scalar_prefetch = 0 : i64, scratch_operands = 1 : i64, tpu.core_type = #tpu.core_type<tc>, window_params = [{pipeline_mode = #tpu.pipeline_mode<synchronous>, transform_indices = @transform_0, window_bounds = array<i64: 16, 128>}, {pipeline_mode = #tpu.pipeline_mode<synchronous>, transform_indices = @transform_1, window_bounds = array<i64: 3, 144, 128>}, {pipeline_mode = #tpu.pipeline_mode<synchronous>, transform_indices = @transform_2, window_bounds = array<i64: 1, 128>}, {pipeline_mode = #tpu.pipeline_mode<synchronous>, transform_indices = @transform_3, window_bounds = array<i64: 1, 128>}, {pipeline_mode = #tpu.pipeline_mode<synchronous>, transform_indices = @transform_4, window_bounds = array<i64: 1, 128>}, {pipeline_mode = #tpu.pipeline_mode<synchronous>, transform_indices = @transform_5, window_bounds = array<i64: 3, 144, 128>}, {pipeline_mode = #tpu.pipeline_mode<synchronous>, transform_indices = @transform_6, window_bounds = array<i64: 1, 128>}, {pipeline_mode = #tpu.pipeline_mode<synchronous>, transform_indices = @transform_7, window_bounds = array<i64: 1, 128>}, {pipeline_mode = #tpu.pipeline_mode<synchronous>, transform_indices = @transform_8, window_bounds = array<i64: 1, 128>}, {pipeline_mode = #tpu.pipeline_mode<synchronous>, transform_indices = @transform_9, window_bounds = array<i64: 16, 128>}]} {
    %cst = arith.constant 0.000000e+00 : bf16
    %0 = vector.broadcast %cst : bf16 to vector<18x144xbf16>
    %c0 = arith.constant 0 : index
    %c0_0 = arith.constant 0 : index
    %1 = vector.load %arg11[%c0, %c0_0] : memref<18x144xbf16, #tpu.memory_space<vmem>>, vector<18x144xbf16>
    tpu.vector_store %arg11[%c0, %c0_0], %0 {strides = array<i32>} : memref<18x144xbf16, #tpu.memory_space<vmem>>, vector<18x144xbf16>,
    %c0_1 = arith.constant 0 : index
    %c0_2 = arith.constant 0 : index
    %2 = vector.load %arg1[%c0_1, %c0_2] : memref<16x128xf32, #tpu.memory_space<vmem>>, vector<16x128xf32>
    %3 = arith.truncf %2 : vector<16x128xf32> to vector<16x128xbf16>
    %c1 = arith.constant 1 : index
    %c0_3 = arith.constant 0 : index
    %4 = vector.load %arg11[%c1, %c0_3] : memref<18x144xbf16, #tpu.memory_space<vmem>>, vector<16x128xbf16>
    tpu.vector_store %arg11[%c1, %c0_3], %3 {strides = array<i32>} : memref<18x144xbf16, #tpu.memory_space<vmem>>, vector<16x128xbf16>,
    %c0_4 = arith.constant 0 : index
    %c0_5 = arith.constant 0 : index
    %5 = vector.load %arg11[%c0_4, %c0_5] : memref<18x144xbf16, #tpu.memory_space<vmem>>, vector<16x144xbf16>
    %c0_6 = arith.constant 0 : index
    %c0_7 = arith.constant 0 : index
    %c0_8 = arith.constant 0 : index
    %6 = vector.load %arg2[%c0_6, %c0_7, %c0_8] : memref<3x144x128xbf16, #tpu.memory_space<vmem>>, vector<1x144x128xbf16>
    %7 = vector.shape_cast %6 : vector<1x144x128xbf16> to vector<144x128xbf16>
    %cst_9 = arith.constant dense<0.000000e+00> : vector<16x128xf32>
    %8 = tpu.matmul %5, %7, %cst_9 {dimension_numbers = #tpu.dot_dimension_numbers<[1], [0], [0], [1], [0, 0, 1, 1], [], []>} : vector<16x144xbf16>, vector<144x128xbf16>, vector<16x128xf32> -> vector<16x128xf32>
    %c1_10 = arith.constant 1 : index
    %c0_11 = arith.constant 0 : index
    %9 = vector.load %arg11[%c1_10, %c0_11] : memref<18x144xbf16, #tpu.memory_space<vmem>>, vector<16x144xbf16>
    %c1_12 = arith.constant 1 : index
    %c0_13 = arith.constant 0 : index
    %c0_14 = arith.constant 0 : index
    %10 = vector.load %arg2[%c1_12, %c0_13, %c0_14] : memref<3x144x128xbf16, #tpu.memory_space<vmem>>, vector<1x144x128xbf16>
    %11 = vector.shape_cast %10 : vector<1x144x128xbf16> to vector<144x128xbf16>
    %cst_15 = arith.constant dense<0.000000e+00> : vector<16x128xf32>
    %12 = tpu.matmul %9, %11, %cst_15 {dimension_numbers = #tpu.dot_dimension_numbers<[1], [0], [0], [1], [0, 0, 1, 1], [], []>} : vector<16x144xbf16>, vector<144x128xbf16>, vector<16x128xf32> -> vector<16x128xf32>
    %13 = arith.addf %8, %12 : vector<16x128xf32>
    %c2 = arith.constant 2 : index
    %c0_16 = arith.constant 0 : index
    %14 = vector.load %arg11[%c2, %c0_16] : memref<18x144xbf16, #tpu.memory_space<vmem>>, vector<16x144xbf16>
    %c2_17 = arith.constant 2 : index
    %c0_18 = arith.constant 0 : index
    %c0_19 = arith.constant 0 : index
    %15 = vector.load %arg2[%c2_17, %c0_18, %c0_19] : memref<3x144x128xbf16, #tpu.memory_space<vmem>>, vector<1x144x128xbf16>
    %16 = vector.shape_cast %15 : vector<1x144x128xbf16> to vector<144x128xbf16>
    %cst_20 = arith.constant dense<0.000000e+00> : vector<16x128xf32>
    %17 = tpu.matmul %14, %16, %cst_20 {dimension_numbers = #tpu.dot_dimension_numbers<[1], [0], [0], [1], [0, 0, 1, 1], [], []>} : vector<16x144xbf16>, vector<144x128xbf16>, vector<16x128xf32> -> vector<16x128xf32>
    %18 = arith.addf %13, %17 : vector<16x128xf32>
    %c0_21 = arith.constant 0 : index
    %c0_22 = arith.constant 0 : index
    %19 = vector.load %arg3[%c0_21, %c0_22] : memref<1x128xf32, #tpu.memory_space<vmem>>, vector<1x128xf32>
    %20 = vector.broadcast %19 : vector<1x128xf32> to vector<16x128xf32>
    %21 = arith.addf %18, %20 : vector<16x128xf32>
    %c0_23 = arith.constant 0 : index
    %c0_24 = arith.constant 0 : index
    %22 = vector.load %arg4[%c0_23, %c0_24] : memref<1x128xf32, #tpu.memory_space<vmem>>, vector<1x128xf32>
    %c0_25 = arith.constant 0 : index
    %c0_26 = arith.constant 0 : index
    %23 = vector.load %arg5[%c0_25, %c0_26] : memref<1x128xf32, #tpu.memory_space<vmem>>, vector<1x128xf32>
    %cst_27 = arith.constant dense<0.000000e+00> : vector<128xf32>
    %24 = vector.multi_reduction <add>, %21, %cst_27 [0] : vector<16x128xf32> to vector<128xf32>
    %25 = vector.shape_cast %24 : vector<128xf32> to vector<1x128xf32>
    %c4_i32 = arith.constant 4 : i32
    %26 = tpu.dynamic_rotate %25 by %c4_i32 dim 1 : vector<1x128xf32>, i32 -> vector<1x128xf32>
    %27 = arith.addf %25, %26 : vector<1x128xf32>
    %c8_i32 = arith.constant 8 : i32
    %28 = tpu.dynamic_rotate %27 by %c8_i32 dim 1 : vector<1x128xf32>, i32 -> vector<1x128xf32>
    %29 = arith.addf %27, %28 : vector<1x128xf32>
    %c16_i32 = arith.constant 16 : i32
    %30 = tpu.dynamic_rotate %29 by %c16_i32 dim 1 : vector<1x128xf32>, i32 -> vector<1x128xf32>
    %31 = arith.addf %29, %30 : vector<1x128xf32>
    %c32_i32 = arith.constant 32 : i32
    %32 = tpu.dynamic_rotate %31 by %c32_i32 dim 1 : vector<1x128xf32>, i32 -> vector<1x128xf32>
    %33 = arith.addf %31, %32 : vector<1x128xf32>
    %c64_i32 = arith.constant 64 : i32
    %34 = tpu.dynamic_rotate %33 by %c64_i32 dim 1 : vector<1x128xf32>, i32 -> vector<1x128xf32>
    %35 = arith.addf %33, %34 : vector<1x128xf32>
    %cst_28 = arith.constant 0.001953125 : f32
    %36 = vector.broadcast %cst_28 : f32 to vector<1x128xf32>
    %37 = arith.mulf %35, %36 : vector<1x128xf32>
    %38 = vector.broadcast %37 : vector<1x128xf32> to vector<16x128xf32>
    %39 = arith.subf %21, %38 : vector<16x128xf32>
    %40 = arith.mulf %39, %39 : vector<16x128xf32>
    %cst_29 = arith.constant dense<0.000000e+00> : vector<128xf32>
    %41 = vector.multi_reduction <add>, %40, %cst_29 [0] : vector<16x128xf32> to vector<128xf32>
    %42 = vector.shape_cast %41 : vector<128xf32> to vector<1x128xf32>
    %c4_i32_30 = arith.constant 4 : i32
    %43 = tpu.dynamic_rotate %42 by %c4_i32_30 dim 1 : vector<1x128xf32>, i32 -> vector<1x128xf32>
    %44 = arith.addf %42, %43 : vector<1x128xf32>
    %c8_i32_31 = arith.constant 8 : i32
    %45 = tpu.dynamic_rotate %44 by %c8_i32_31 dim 1 : vector<1x128xf32>, i32 -> vector<1x128xf32>
    %46 = arith.addf %44, %45 : vector<1x128xf32>
    %c16_i32_32 = arith.constant 16 : i32
    %47 = tpu.dynamic_rotate %46 by %c16_i32_32 dim 1 : vector<1x128xf32>, i32 -> vector<1x128xf32>
    %48 = arith.addf %46, %47 : vector<1x128xf32>
    %c32_i32_33 = arith.constant 32 : i32
    %49 = tpu.dynamic_rotate %48 by %c32_i32_33 dim 1 : vector<1x128xf32>, i32 -> vector<1x128xf32>
    %50 = arith.addf %48, %49 : vector<1x128xf32>
    %c64_i32_34 = arith.constant 64 : i32
    %51 = tpu.dynamic_rotate %50 by %c64_i32_34 dim 1 : vector<1x128xf32>, i32 -> vector<1x128xf32>
    %52 = arith.addf %50, %51 : vector<1x128xf32>
    %cst_35 = arith.constant 0.001953125 : f32
    %53 = vector.broadcast %cst_35 : f32 to vector<1x128xf32>
    %54 = arith.mulf %52, %53 : vector<1x128xf32>
    %cst_36 = arith.constant 9.99999974E-6 : f32
    %55 = vector.broadcast %cst_36 : f32 to vector<1x128xf32>
    %56 = arith.addf %54, %55 : vector<1x128xf32>
    %57 = math.rsqrt %56 : vector<1x128xf32>
    %58 = arith.mulf %22, %57 : vector<1x128xf32>
    %59 = vector.broadcast %58 : vector<1x128xf32> to vector<16x128xf32>
    %60 = arith.mulf %39, %59 : vector<16x128xf32>
    %61 = vector.broadcast %23 : vector<1x128xf32> to vector<16x128xf32>
    %62 = arith.addf %60, %61 : vector<16x128xf32>
    %cst_37 = arith.constant 0.000000e+00 : f32
    %63 = vector.broadcast %cst_37 : f32 to vector<16x128xf32>
    %64 = arith.cmpf oge, %62, %63 : vector<16x128xf32>
    %cst_38 = arith.constant 0.00999999977 : f32
    %65 = vector.broadcast %cst_38 : f32 to vector<16x128xf32>
    %66 = arith.mulf %65, %62 : vector<16x128xf32>
    %67 = arith.select %64, %62, %66 : vector<16x128xi1>, vector<16x128xf32>
    %68 = arith.truncf %67 : vector<16x128xf32> to vector<16x128xbf16>
    %c1_39 = arith.constant 1 : index
    %c0_40 = arith.constant 0 : index
    %69 = vector.load %arg11[%c1_39, %c0_40] : memref<18x144xbf16, #tpu.memory_space<vmem>>, vector<16x128xbf16>
    tpu.vector_store %arg11[%c1_39, %c0_40], %68 {strides = array<i32>} : memref<18x144xbf16, #tpu.memory_space<vmem>>, vector<16x128xbf16>,
    %c0_41 = arith.constant 0 : index
    %c0_42 = arith.constant 0 : index
    %70 = vector.load %arg11[%c0_41, %c0_42] : memref<18x144xbf16, #tpu.memory_space<vmem>>, vector<16x144xbf16>
    %c0_43 = arith.constant 0 : index
    %c0_44 = arith.constant 0 : index
    %c0_45 = arith.constant 0 : index
    %71 = vector.load %arg6[%c0_43, %c0_44, %c0_45] : memref<3x144x128xbf16, #tpu.memory_space<vmem>>, vector<1x144x128xbf16>
    %72 = vector.shape_cast %71 : vector<1x144x128xbf16> to vector<144x128xbf16>
    %cst_46 = arith.constant dense<0.000000e+00> : vector<16x128xf32>
    %73 = tpu.matmul %70, %72, %cst_46 {dimension_numbers = #tpu.dot_dimension_numbers<[1], [0], [0], [1], [0, 0, 1, 1], [], []>} : vector<16x144xbf16>, vector<144x128xbf16>, vector<16x128xf32> -> vector<16x128xf32>
    %c1_47 = arith.constant 1 : index
    %c0_48 = arith.constant 0 : index
    %74 = vector.load %arg11[%c1_47, %c0_48] : memref<18x144xbf16, #tpu.memory_space<vmem>>, vector<16x144xbf16>
    %c1_49 = arith.constant 1 : index
    %c0_50 = arith.constant 0 : index
    %c0_51 = arith.constant 0 : index
    %75 = vector.load %arg6[%c1_49, %c0_50, %c0_51] : memref<3x144x128xbf16, #tpu.memory_space<vmem>>, vector<1x144x128xbf16>
    %76 = vector.shape_cast %75 : vector<1x144x128xbf16> to vector<144x128xbf16>
    %cst_52 = arith.constant dense<0.000000e+00> : vector<16x128xf32>
    %77 = tpu.matmul %74, %76, %cst_52 {dimension_numbers = #tpu.dot_dimension_numbers<[1], [0], [0], [1], [0, 0, 1, 1], [], []>} : vector<16x144xbf16>, vector<144x128xbf16>, vector<16x128xf32> -> vector<16x128xf32>
    %78 = arith.addf %73, %77 : vector<16x128xf32>
    %c2_53 = arith.constant 2 : index
    %c0_54 = arith.constant 0 : index
    %79 = vector.load %arg11[%c2_53, %c0_54] : memref<18x144xbf16, #tpu.memory_space<vmem>>, vector<16x144xbf16>
    %c2_55 = arith.constant 2 : index
    %c0_56 = arith.constant 0 : index
    %c0_57 = arith.constant 0 : index
    %80 = vector.load %arg6[%c2_55, %c0_56, %c0_57] : memref<3x144x128xbf16, #tpu.memory_space<vmem>>, vector<1x144x128xbf16>
    %81 = vector.shape_cast %80 : vector<1x144x128xbf16> to vector<144x128xbf16>
    %cst_58 = arith.constant dense<0.000000e+00> : vector<16x128xf32>
    %82 = tpu.matmul %79, %81, %cst_58 {dimension_numbers = #tpu.dot_dimension_numbers<[1], [0], [0], [1], [0, 0, 1, 1], [], []>} : vector<16x144xbf16>, vector<144x128xbf16>, vector<16x128xf32> -> vector<16x128xf32>
    %83 = arith.addf %78, %82 : vector<16x128xf32>
    %c0_59 = arith.constant 0 : index
    %c0_60 = arith.constant 0 : index
    %84 = vector.load %arg7[%c0_59, %c0_60] : memref<1x128xf32, #tpu.memory_space<vmem>>, vector<1x128xf32>
    %85 = vector.broadcast %84 : vector<1x128xf32> to vector<16x128xf32>
    %86 = arith.addf %83, %85 : vector<16x128xf32>
    %c0_61 = arith.constant 0 : index
    %c0_62 = arith.constant 0 : index
    %87 = vector.load %arg8[%c0_61, %c0_62] : memref<1x128xf32, #tpu.memory_space<vmem>>, vector<1x128xf32>
    %c0_63 = arith.constant 0 : index
    %c0_64 = arith.constant 0 : index
    %88 = vector.load %arg9[%c0_63, %c0_64] : memref<1x128xf32, #tpu.memory_space<vmem>>, vector<1x128xf32>
    %cst_65 = arith.constant dense<0.000000e+00> : vector<128xf32>
    %89 = vector.multi_reduction <add>, %86, %cst_65 [0] : vector<16x128xf32> to vector<128xf32>
    %90 = vector.shape_cast %89 : vector<128xf32> to vector<1x128xf32>
    %c4_i32_66 = arith.constant 4 : i32
    %91 = tpu.dynamic_rotate %90 by %c4_i32_66 dim 1 : vector<1x128xf32>, i32 -> vector<1x128xf32>
    %92 = arith.addf %90, %91 : vector<1x128xf32>
    %c8_i32_67 = arith.constant 8 : i32
    %93 = tpu.dynamic_rotate %92 by %c8_i32_67 dim 1 : vector<1x128xf32>, i32 -> vector<1x128xf32>
    %94 = arith.addf %92, %93 : vector<1x128xf32>
    %c16_i32_68 = arith.constant 16 : i32
    %95 = tpu.dynamic_rotate %94 by %c16_i32_68 dim 1 : vector<1x128xf32>, i32 -> vector<1x128xf32>
    %96 = arith.addf %94, %95 : vector<1x128xf32>
    %c32_i32_69 = arith.constant 32 : i32
    %97 = tpu.dynamic_rotate %96 by %c32_i32_69 dim 1 : vector<1x128xf32>, i32 -> vector<1x128xf32>
    %98 = arith.addf %96, %97 : vector<1x128xf32>
    %c64_i32_70 = arith.constant 64 : i32
    %99 = tpu.dynamic_rotate %98 by %c64_i32_70 dim 1 : vector<1x128xf32>, i32 -> vector<1x128xf32>
    %100 = arith.addf %98, %99 : vector<1x128xf32>
    %cst_71 = arith.constant 0.001953125 : f32
    %101 = vector.broadcast %cst_71 : f32 to vector<1x128xf32>
    %102 = arith.mulf %100, %101 : vector<1x128xf32>
    %103 = vector.broadcast %102 : vector<1x128xf32> to vector<16x128xf32>
    %104 = arith.subf %86, %103 : vector<16x128xf32>
    %105 = arith.mulf %104, %104 : vector<16x128xf32>
    %cst_72 = arith.constant dense<0.000000e+00> : vector<128xf32>
    %106 = vector.multi_reduction <add>, %105, %cst_72 [0] : vector<16x128xf32> to vector<128xf32>
    %107 = vector.shape_cast %106 : vector<128xf32> to vector<1x128xf32>
    %c4_i32_73 = arith.constant 4 : i32
    %108 = tpu.dynamic_rotate %107 by %c4_i32_73 dim 1 : vector<1x128xf32>, i32 -> vector<1x128xf32>
    %109 = arith.addf %107, %108 : vector<1x128xf32>
    %c8_i32_74 = arith.constant 8 : i32
    %110 = tpu.dynamic_rotate %109 by %c8_i32_74 dim 1 : vector<1x128xf32>, i32 -> vector<1x128xf32>
    %111 = arith.addf %109, %110 : vector<1x128xf32>
    %c16_i32_75 = arith.constant 16 : i32
    %112 = tpu.dynamic_rotate %111 by %c16_i32_75 dim 1 : vector<1x128xf32>, i32 -> vector<1x128xf32>
    %113 = arith.addf %111, %112 : vector<1x128xf32>
    %c32_i32_76 = arith.constant 32 : i32
    %114 = tpu.dynamic_rotate %113 by %c32_i32_76 dim 1 : vector<1x128xf32>, i32 -> vector<1x128xf32>
    %115 = arith.addf %113, %114 : vector<1x128xf32>
    %c64_i32_77 = arith.constant 64 : i32
    %116 = tpu.dynamic_rotate %115 by %c64_i32_77 dim 1 : vector<1x128xf32>, i32 -> vector<1x128xf32>
    %117 = arith.addf %115, %116 : vector<1x128xf32>
    %cst_78 = arith.constant 0.001953125 : f32
    %118 = vector.broadcast %cst_78 : f32 to vector<1x128xf32>
    %119 = arith.mulf %117, %118 : vector<1x128xf32>
    %cst_79 = arith.constant 9.99999974E-6 : f32
    %120 = vector.broadcast %cst_79 : f32 to vector<1x128xf32>
    %121 = arith.addf %119, %120 : vector<1x128xf32>
    %122 = math.rsqrt %121 : vector<1x128xf32>
    %123 = arith.mulf %87, %122 : vector<1x128xf32>
    %124 = vector.broadcast %123 : vector<1x128xf32> to vector<16x128xf32>
    %125 = arith.mulf %104, %124 : vector<16x128xf32>
    %126 = vector.broadcast %88 : vector<1x128xf32> to vector<16x128xf32>
    %127 = arith.addf %125, %126 : vector<16x128xf32>
    %128 = arith.addf %127, %2 : vector<16x128xf32>
    %cst_80 = arith.constant 0.000000e+00 : f32
    %129 = vector.broadcast %cst_80 : f32 to vector<16x128xf32>
    %130 = arith.cmpf oge, %128, %129 : vector<16x128xf32>
    %cst_81 = arith.constant 0.00999999977 : f32
    %131 = vector.broadcast %cst_81 : f32 to vector<16x128xf32>
    %132 = arith.mulf %131, %128 : vector<16x128xf32>
    %133 = arith.select %130, %128, %132 : vector<16x128xi1>, vector<16x128xf32>
    %c0_82 = arith.constant 0 : index
    %c0_83 = arith.constant 0 : index
    %134 = vector.load %arg10[%c0_82, %c0_83] : memref<16x128xf32, #tpu.memory_space<vmem>>, vector<16x128xf32>
    tpu.vector_store %arg10[%c0_82, %c0_83], %133 {strides = array<i32>} : memref<16x128xf32, #tpu.memory_space<vmem>>, vector<16x128xf32>,
    return
  }
  func.func @transform_0(%arg0: i32) -> (i32, i32) {
    %c0_i32 = arith.constant 0 : i32
    %c0_i32_0 = arith.constant 0 : i32
    %c0_i32_1 = arith.constant 0 : i32
    return %c0_i32, %c0_i32_0 : i32, i32
  }
  func.func @transform_1(%arg0: i32) -> (i32, i32, i32) {
    %c0_i32 = arith.constant 0 : i32
    %c0_i32_0 = arith.constant 0 : i32
    %c0_i32_1 = arith.constant 0 : i32
    %c0_i32_2 = arith.constant 0 : i32
    return %c0_i32, %c0_i32_0, %c0_i32_1 : i32, i32, i32
  }
  func.func @transform_2(%arg0: i32) -> (i32, i32) {
    %c0_i32 = arith.constant 0 : i32
    %c0_i32_0 = arith.constant 0 : i32
    %c0_i32_1 = arith.constant 0 : i32
    return %c0_i32, %c0_i32_0 : i32, i32
  }
  func.func @transform_3(%arg0: i32) -> (i32, i32) {
    %c0_i32 = arith.constant 0 : i32
    %c0_i32_0 = arith.constant 0 : i32
    %c0_i32_1 = arith.constant 0 : i32
    return %c0_i32, %c0_i32_0 : i32, i32
  }
  func.func @transform_4(%arg0: i32) -> (i32, i32) {
    %c0_i32 = arith.constant 0 : i32
    %c0_i32_0 = arith.constant 0 : i32
    %c0_i32_1 = arith.constant 0 : i32
    return %c0_i32, %c0_i32_0 : i32, i32
  }
  func.func @transform_5(%arg0: i32) -> (i32, i32, i32) {
    %c0_i32 = arith.constant 0 : i32
    %c0_i32_0 = arith.constant 0 : i32
    %c0_i32_1 = arith.constant 0 : i32
    %c0_i32_2 = arith.constant 0 : i32
    return %c0_i32, %c0_i32_0, %c0_i32_1 : i32, i32, i32
  }
  func.func @transform_6(%arg0: i32) -> (i32, i32) {
    %c0_i32 = arith.constant 0 : i32
    %c0_i32_0 = arith.constant 0 : i32
    %c0_i32_1 = arith.constant 0 : i32
    return %c0_i32, %c0_i32_0 : i32, i32
  }
  func.func @transform_7(%arg0: i32) -> (i32, i32) {
    %c0_i32 = arith.constant 0 : i32
    %c0_i32_0 = arith.constant 0 : i32
    %c0_i32_1 = arith.constant 0 : i32
    return %c0_i32, %c0_i32_0 : i32, i32
  }
  func.func @transform_8(%arg0: i32) -> (i32, i32) {
    %c0_i32 = arith.constant 0 : i32
    %c0_i32_0 = arith.constant 0 : i32
    %c0_i32_1 = arith.constant 0 : i32
    return %c0_i32, %c0_i32_0 : i32, i32
  }
  func.func @transform_9(%arg0: i32) -> (i32, i32) {
    %c0_i32 = arith.constant 0 : i32
    %c0_i32_0 = arith.constant 0 : i32
    %c0_i32_1 = arith.constant 0 : i32
    return %c0_i32, %c0_i32_0 : i32, i32
  }
}

</mosaic_0001>

<llo_original>
// kernel: tile.33
$region0: #{tile.33}
  #allocation0 [shape = 's32[1]{0}', space=sflag, size = 0x4, scoped, tag = 'scoped memory for tile.33']
  %s0 = inlined_call_operand.vmem [shape: f32[4], index: 0, kind: input, shape index: {}]
  %s1 = inlined_call_operand.vmem [shape: f32[32,4], index: 1, kind: output, shape index: {}]
  // Predicated region
  $region2: #{tile.33} parent=0 // pred_check
    _
  $region3: #{tile.33} parent=0 // pred_check_branch
    %3 = sbr.rel (0) target = $region5
  $region4: #{tile.33} parent=0 // pred_region
    _
  $region5: #{tile.33} parent=0 // pred_fallthru
    _
  %v4 = vld [vmem:[%s0] ss:$0 sm:$0xff]
  %5 = vst [vmem:[%s1] sm:$0xff] %v4
  %s6 = scalar_lea.vmem %s1, 8
  %7 = vst [vmem:[%s6] sm:$0xff] %v4
  %s8 = scalar_lea.vmem %s1, 16
  %9 = vst [vmem:[%s8] sm:$0xff] %v4
  %s10 = scalar_lea.vmem %s1, 24
  %11 = vst [vmem:[%s10] sm:$0xff] %v4

// kernel: tile.34
$region0: #{tile.34}
  %s0 = inlined_call_operand.vmem [shape: f32[32,4], index: 0, kind: input, shape index: {}]
  %s1 = inlined_call_operand.vmem [shape: f32[1,128], index: 1, kind: output, shape index: {}]
  $region1: #{tile.34} parent=0
    #allocation0 [shape = 'u8[4096]{0}', space=vmem, size = 0x1000, scoped, tag = 'scoped mem for output reshape']
    %v2 = vld [vmem:[%s0] sm:$0x1]
    %vm3 = vcmask 31744
    %4 = vst.msk [vmem:[#allocation0] sm:$0x1] %vm3, %v2
    %s5 = scalar_lea.vmem %s0, 31
    %v6 = vld [vmem:[%s5] sm:$0x1]
    %7 = vrot.lane.b32.xlu0 %v6, 124
    %v8 = vpop.permute.xlu0 %7
    %vm9 = vcmask 1048544
    %10 = vst.msk [vmem:[#allocation0] sm:$0x1] %vm9, %v8
    %s11 = scalar_lea.vmem %s0, 30
    %v12 = vld [vmem:[%s11] sm:$0x1]
    %13 = vrot.lane.b32.xlu0 %v12, 120
    %v14 = vpop.permute.xlu0 %13
    %vm15 = vcmask 1015744
    %16 = vst.msk [vmem:[#allocation0] sm:$0x1] %vm15, %v14
    %s17 = scalar_lea.vmem %s0, 29
    %v18 = vld [vmem:[%s17] sm:$0x1]
    %19 = vrot.lane.b32.xlu0 %v18, 116
    %v20 = vpop.permute.xlu0 %19
    %vm21 = vcmask 982944
    %22 = vst.msk [vmem:[#allocation0] sm:$0x1] %vm21, %v20
    %s23 = scalar_lea.vmem %s0, 28
    %v24 = vld [vmem:[%s23] sm:$0x1]
    %25 = vrot.lane.b32.xlu0 %v24, 112
    %v26 = vpop.permute.xlu0 %25
    %vm27 = vcmask 950144
    %28 = vst.msk [vmem:[#allocation0] sm:$0x1] %vm27, %v26
    %s29 = scalar_lea.vmem %s0, 27
    %v30 = vld [vmem:[%s29] sm:$0x1]
    %31 = vrot.lane.b32.xlu0 %v30, 108
    %v32 = vpop.permute.xlu0 %31
    %vm33 = vcmask 917344
    %34 = vst.msk [vmem:[#allocation0] sm:$0x1] %vm33, %v32
    %s35 = scalar_lea.vmem %s0, 26
    %v36 = vld [vmem:[%s35] sm:$0x1]
    %37 = vrot.lane.b32.xlu0 %v36, 104
    %v38 = vpop.permute.xlu0 %37
    %vm39 = vcmask 884544
    %40 = vst.msk [vmem:[#allocation0] sm:$0x1] %vm39, %v38
    %s41 = scalar_lea.vmem %s0, 25
    %v42 = vld [vmem:[%s41] sm:$0x1]
    %43 = vrot.lane.b32.xlu0 %v42, 100
    %v44 = vpop.permute.xlu0 %43
    %vm45 = vcmask 851744
    %46 = vst.msk [vmem:[#allocation0] sm:$0x1] %vm45, %v44
    %s47 = scalar_lea.vmem %s0, 24
    %v48 = vld [vmem:[%s47] sm:$0x1]
    %49 = vrot.lane.b32.xlu0 %v48, 96
    %v50 = vpop.permute.xlu0 %49
    %vm51 = vcmask 818944
    %52 = vst.msk [vmem:[#allocation0] sm:$0x1] %vm51, %v50
    %s53 = scalar_lea.vmem %s0, 23
    %v54 = vld [vmem:[%s53] sm:$0x1]
    %55 = vrot.lane.b32.xlu0 %v54, 92
    %v56 = vpop.permute.xlu0 %55
    %vm57 = vcmask 786144
    %58 = vst.msk [vmem:[#allocation0] sm:$0x1] %vm57, %v56
    %s59 = scalar_lea.vmem %s0, 22
    %v60 = vld [vmem:[%s59] sm:$0x1]
    %61 = vrot.lane.b32.xlu0 %v60, 88
    %v62 = vpop.permute.xlu0 %61
    %vm63 = vcmask 753344
    %64 = vst.msk [vmem:[#allocation0] sm:$0x1] %vm63, %v62
    %s65 = scalar_lea.vmem %s0, 21
    %v66 = vld [vmem:[%s65] sm:$0x1]
    %67 = vrot.lane.b32.xlu0 %v66, 84
    %v68 = vpop.permute.xlu0 %67
    %vm69 = vcmask 720544
    %70 = vst.msk [vmem:[#allocation0] sm:$0x1] %vm69, %v68
    %s71 = scalar_lea.vmem %s0, 20
    %v72 = vld [vmem:[%s71] sm:$0x1]
    %73 = vrot.lane.b32.xlu0 %v72, 80
    %v74 = vpop.permute.xlu0 %73
    %vm75 = vcmask 687744
    %76 = vst.msk [vmem:[#allocation0] sm:$0x1] %vm75, %v74
    %s77 = scalar_lea.vmem %s0, 19
    %v78 = vld [vmem:[%s77] sm:$0x1]
    %79 = vrot.lane.b32.xlu0 %v78, 76
    %v80 = vpop.permute.xlu0 %79
    %vm81 = vcmask 654944
    %82 = vst.msk [vmem:[#allocation0] sm:$0x1] %vm81, %v80
    %s83 = scalar_lea.vmem %s0, 18
    %v84 = vld [vmem:[%s83] sm:$0x1]
    %85 = vrot.lane.b32.xlu0 %v84, 72
    %v86 = vpop.permute.xlu0 %85
    %vm87 = vcmask 622144
    %88 = vst.msk [vmem:[#allocation0] sm:$0x1] %vm87, %v86
    %s89 = scalar_lea.vmem %s0, 17
    %v90 = vld [vmem:[%s89] sm:$0x1]
    %91 = vrot.lane.b32.xlu0 %v90, 68
    %v92 = vpop.permute.xlu0 %91
    %vm93 = vcmask 589344
    %94 = vst.msk [vmem:[#allocation0] sm:$0x1] %vm93, %v92
    %s95 = scalar_lea.vmem %s0, 16
    %v96 = vld [vmem:[%s95] sm:$0x1]
    %97 = vrot.lane.b32.xlu0 %v96, 64
    %v98 = vpop.permute.xlu0 %97
    %vm99 = vcmask 556544
    %100 = vst.msk [vmem:[#allocation0] sm:$0x1] %vm99, %v98
    %s101 = scalar_lea.vmem %s0, 15
    %v102 = vld [vmem:[%s101] sm:$0x1]
    %103 = vrot.lane.b32.xlu0 %v102, 60
    %v104 = vpop.permute.xlu0 %103
    %vm105 = vcmask 523744
    %106 = vst.msk [vmem:[#allocation0] sm:$0x1] %vm105, %v104
    %s107 = scalar_lea.vmem %s0, 14
    %v108 = vld [vmem:[%s107] sm:$0x1]
    %109 = vrot.lane.b32.xlu0 %v108, 56
    %v110 = vpop.permute.xlu0 %109
    %vm111 = vcmask 490944
    %112 = vst.msk [vmem:[#allocation0] sm:$0x1] %vm111, %v110
    %s113 = scalar_lea.vmem %s0, 13
    %v114 = vld [vmem:[%s113] sm:$0x1]
    %115 = vrot.lane.b32.xlu0 %v114, 52
    %v116 = vpop.permute.xlu0 %115
    %vm117 = vcmask 458144
    %118 = vst.msk [vmem:[#allocation0] sm:$0x1] %vm117, %v116
    %s119 = scalar_lea.vmem %s0, 12
    %v120 = vld [vmem:[%s119] sm:$0x1]
    %121 = vrot.lane.b32.xlu0 %v120, 48
    %v122 = vpop.permute.xlu0 %121
    %vm123 = vcmask 425344
    %124 = vst.msk [vmem:[#allocation0] sm:$0x1] %vm123, %v122
    %s125 = scalar_lea.vmem %s0, 11
    %v126 = vld [vmem:[%s125] sm:$0x1]
    %127 = vrot.lane.b32.xlu0 %v126, 44
    %v128 = vpop.permute.xlu0 %127
    %vm129 = vcmask 392544
    %130 = vst.msk [vmem:[#allocation0] sm:$0x1] %vm129, %v128
    %s131 = scalar_lea.vmem %s0, 10
    %v132 = vld [vmem:[%s131] sm:$0x1]
    %133 = vrot.lane.b32.xlu0 %v132, 40
    %v134 = vpop.permute.xlu0 %133
    %vm135 = vcmask 359744
    %136 = vst.msk [vmem:[#allocation0] sm:$0x1] %vm135, %v134
    %s137 = scalar_lea.vmem %s0, 9
    %v138 = vld [vmem:[%s137] sm:$0x1]
    %139 = vrot.lane.b32.xlu0 %v138, 36
    %v140 = vpop.permute.xlu0 %139
    %vm141 = vcmask 326944
    %142 = vst.msk [vmem:[#allocation0] sm:$0x1] %vm141, %v140
    %s143 = scalar_lea.vmem %s0, 8
    %v144 = vld [vmem:[%s143] sm:$0x1]
    %145 = vrot.lane.b32.xlu0 %v144, 32
    %v146 = vpop.permute.xlu0 %145
    %vm147 = vcmask 294144
    %148 = vst.msk [vmem:[#allocation0] sm:$0x1] %vm147, %v146
    %s149 = scalar_lea.vmem %s0, 7
    %v150 = vld [vmem:[%s149] sm:$0x1]
    %151 = vrot.lane.b32.xlu0 %v150, 28
    %v152 = vpop.permute.xlu0 %151
    %vm153 = vcmask 261344
    %154 = vst.msk [vmem:[#allocation0] sm:$0x1] %vm153, %v152
    %s155 = scalar_lea.vmem %s0, 6
    %v156 = vld [vmem:[%s155] sm:$0x1]
    %157 = vrot.lane.b32.xlu0 %v156, 24
    %v158 = vpop.permute.xlu0 %157
    %vm159 = vcmask 228544
    %160 = vst.msk [vmem:[#allocation0] sm:$0x1] %vm159, %v158
    %s161 = scalar_lea.vmem %s0, 5
    %v162 = vld [vmem:[%s161] sm:$0x1]
    %163 = vrot.lane.b32.xlu0 %v162, 20
    %v164 = vpop.permute.xlu0 %163
    %vm165 = vcmask 195744
    %166 = vst.msk [vmem:[#allocation0] sm:$0x1] %vm165, %v164
    %s167 = scalar_lea.vmem %s0, 4
    %v168 = vld [vmem:[%s167] sm:$0x1]
    %169 = vrot.lane.b32.xlu0 %v168, 16
    %v170 = vpop.permute.xlu0 %169
    %vm171 = vcmask 162944
    %172 = vst.msk [vmem:[#allocation0] sm:$0x1] %vm171, %v170
    %s173 = scalar_lea.vmem %s0, 3
    %v174 = vld [vmem:[%s173] sm:$0x1]
    %175 = vrot.lane.b32.xlu0 %v174, 12
    %v176 = vpop.permute.xlu0 %175
    %vm177 = vcmask 130144
    %178 = vst.msk [vmem:[#allocation0] sm:$0x1] %vm177, %v176
    %s179 = scalar_lea.vmem %s0, 2
    %v180 = vld [vmem:[%s179] sm:$0x1]
    %181 = vrot.lane.b32.xlu0 %v180, 8
    %v182 = vpop.permute.xlu0 %181
    %vm183 = vcmask 97344
    %184 = vst.msk [vmem:[#allocation0] sm:$0x1] %vm183, %v182
    %s185 = scalar_lea.vmem %s0, 1
    %v186 = vld [vmem:[%s185] sm:$0x1]
    %187 = vrot.lane.b32.xlu0 %v186, 4
    %v188 = vpop.permute.xlu0 %187
    %vm189 = vcmask 64544
    %190 = vst.msk [vmem:[#allocation0] sm:$0x1] %vm189, %v188
    %s192 = sshll.u32 1, 1
    %s193 = ssub.s32 %s192, 1
    %v195 = vld [vmem:[#allocation0] sm:%s193]
    %s196 = sshll.u32 1, 1
    %s197 = ssub.s32 %s196, 1
    %198 = vst [vmem:[%s1] sm:%s197] %v195

// kernel: conv_block_forward.1
$region0: #{conv_block_forward.1}
  #allocation0 [shape = 'u32[]', space=smem, size = 0x4, offset = 0x4, fixed_abs, tag = 'smem constant byte address 0x4 - core index']
  #allocation1 [shape = 'u32[144,128]{1,0:T(1,128)}', space=vmem, size = 0x12000, scoped, tag = 'internal scratch']
  #allocation2 [shape = 'bf16[18,144]{1,0:T(8,128)(2,1)}', space=vmem, size = 0x3000, scoped, tag = 'scratch operand']
  %s0 = inlined_call_operand.vmem [shape: f32[16,128], index: 0, kind: input, shape index: {}]
  %s1 = inlined_call_operand.vmem [shape: bf16[3,144,128], index: 1, kind: input, shape index: {}]
  %s2 = inlined_call_operand.vmem [shape: f32[1,128], index: 2, kind: input, shape index: {}]
  %s3 = inlined_call_operand.vmem [shape: f32[1,128], index: 3, kind: input, shape index: {}]
  %s4 = inlined_call_operand.vmem [shape: f32[1,128], index: 4, kind: input, shape index: {}]
  %s5 = inlined_call_operand.vmem [shape: bf16[3,144,128], index: 5, kind: input, shape index: {}]
  %s6 = inlined_call_operand.vmem [shape: f32[1,128], index: 6, kind: input, shape index: {}]
  %s7 = inlined_call_operand.vmem [shape: f32[1,128], index: 7, kind: input, shape index: {}]
  %s8 = inlined_call_operand.vmem [shape: f32[1,128], index: 8, kind: input, shape index: {}]
  %s9 = inlined_call_operand.vmem [shape: f32[16,128], index: 9, kind: output, shape index: {}]
  %s10 = sld [smem:[#allocation0]]
  $region46: #{conv_block_forward.1} parent=0
    _
  %s12 = ssub.s32 1, %s10
  %s13 = scalar_select 0, %s12, %s10
  // Predicated region
  $region2: #{conv_block_forward.1} parent=0 // pred_check
    _
  $region3: #{conv_block_forward.1} parent=0 // pred_check_branch
    %15 = sbr.rel (0) target = $region5
  $region4: #{conv_block_forward.1} parent=0 // pred_region
    _
  $region5: #{conv_block_forward.1} parent=0 // pred_fallthru
    _
  // Predicated region
  $region6: #{conv_block_forward.1} parent=0 // pred_check
    _
  $region7: #{conv_block_forward.1} parent=0 // pred_check_branch
    %17 = sbr.rel (0) target = $region9
  $region8: #{conv_block_forward.1} parent=0 // pred_region
    _
  $region9: #{conv_block_forward.1} parent=0 // pred_fallthru
    _
  // Predicated region
  $region10: #{conv_block_forward.1} parent=0 // pred_check
    _
  $region11: #{conv_block_forward.1} parent=0 // pred_check_branch
    %19 = sbr.rel (0) target = $region13
  $region12: #{conv_block_forward.1} parent=0 // pred_region
    _
  $region13: #{conv_block_forward.1} parent=0 // pred_fallthru
    _
  // Predicated region
  $region14: #{conv_block_forward.1} parent=0 // pred_check
    _
  $region15: #{conv_block_forward.1} parent=0 // pred_check_branch
    %21 = sbr.rel (0) target = $region17
  $region16: #{conv_block_forward.1} parent=0 // pred_region
    _
  $region17: #{conv_block_forward.1} parent=0 // pred_fallthru
    _
  // Predicated region
  $region18: #{conv_block_forward.1} parent=0 // pred_check
    _
  $region19: #{conv_block_forward.1} parent=0 // pred_check_branch
    %23 = sbr.rel (0) target = $region21
  $region20: #{conv_block_forward.1} parent=0 // pred_region
    _
  $region21: #{conv_block_forward.1} parent=0 // pred_fallthru
    _
  // Predicated region
  $region22: #{conv_block_forward.1} parent=0 // pred_check
    _
  $region23: #{conv_block_forward.1} parent=0 // pred_check_branch
    %25 = sbr.rel (0) target = $region25
  $region24: #{conv_block_forward.1} parent=0 // pred_region
    _
  $region25: #{conv_block_forward.1} parent=0 // pred_fallthru
    _
  // Predicated region
  $region26: #{conv_block_forward.1} parent=0 // pred_check
    _
  $region27: #{conv_block_forward.1} parent=0 // pred_check_branch
    %27 = sbr.rel (0) target = $region29
  $region28: #{conv_block_forward.1} parent=0 // pred_region
    _
  $region29: #{conv_block_forward.1} parent=0 // pred_fallthru
    _
  // Predicated region
  $region30: #{conv_block_forward.1} parent=0 // pred_check
    _
  $region31: #{conv_block_forward.1} parent=0 // pred_check_branch
    %29 = sbr.rel (0) target = $region33
  $region32: #{conv_block_forward.1} parent=0 // pred_region
    _
  $region33: #{conv_block_forward.1} parent=0 // pred_fallthru
    _
  // Predicated region
  $region34: #{conv_block_forward.1} parent=0 // pred_check
    _
  $region35: #{conv_block_forward.1} parent=0 // pred_check_branch
    %31 = sbr.rel (0) target = $region37
  $region36: #{conv_block_forward.1} parent=0 // pred_region
    _
  $region37: #{conv_block_forward.1} parent=0 // pred_fallthru
    _
  %vm33 = vcmask 1043456
  %vm34 = vcmask 130052
  %vm35 = vmor %vm34, %vm33
  %36 = vst.msk [vmem:[#allocation2] sm:$0xff] %vm35, 0
  %37 = vst.msk [vmem:[#allocation2 + $0x8] sm:$0xff] %vm35, 0
  %vm38 = vcmask 1040384
  %vm39 = vcmask 126980
  %vm40 = vmor %vm39, %vm38
  %41 = vst.msk [vmem:[#allocation2 + $0x10] sm:$0x11] %vm40, 0
  %v42 = vld [vmem:[%s0] sm:$0xff]
  %v43 = vld [vmem:[%s0 + $0x8] sm:$0xff]
  %v44 = vpack.c.bf16 %v43, %v42
  %v46 = vunpack.c.l.b16 %v44
  %v47 = vunpack.c.h.b16 %v44
  %v48 = vpack.c.b16 %v46, %v46
  %v49 = vpack.c.b16 %v47, %v47
  %vm50 = vsmask.f32 256
  %vm51 = vsmask.f32 4368
  %vm52 = vmor %vm50, %vm51
  %v54 = vshrl.u32 %v48, 16
  %v56 = vrot.slane %v54, 7
  %v57 = vshll.u32 %v48, 16
  %v59 = vor.u32 %v56, %v57
  %v60 = vrot.slane %v56, 4
  %v62 = vshrl.u32 %v49, 16
  %v64 = vrot.slane %v62, 7
  %v65 = vshll.u32 %v49, 16
  %v67 = vor.u32 %v64, %v65
  %v68 = vsel %vm52, %v60, %v67
  %v69 = vrot.slane %v64, 4
  %vm73 = vcmask 1043456
  %vm74 = vsmask.f32 7938
  %vm75 = vmand %vm73, %vm74
  %v76 = vld [vmem:[#allocation2] sm:$0xf]
  %v77 = vsel %vm75, %v59, %v76
  %78 = vst [vmem:[#allocation2] sm:$0xf] %v77
  %79 = vst [vmem:[#allocation2 + $0x8] sm:$0xf] %v68
  %vm80 = vcmask 1040384
  %vm81 = vmand %vm80, %vm50
  %v82 = vld [vmem:[#allocation2 + $0x10] sm:$0x1]
  %v83 = vsel %vm81, %v69, %v82
  %84 = vst [vmem:[#allocation2 + $0x10] sm:$0x1] %v83
  %v85 = vld [vmem:[#allocation2] sm:$0xff]
  %v86 = vld [vmem:[#allocation2 + $0x8] sm:$0xff]
  %v87 = vld [vmem:[%s1] sm:$0xf]
  %v88 = vld [vmem:[%s1 + $0x4] sm:$0xf]
  %v89 = vld [vmem:[%s1 + $0x8] sm:$0xf]
  %v90 = vld [vmem:[%s1 + $0xc] sm:$0xf]
  %v91 = vld [vmem:[%s1 + $0x10] sm:$0xf]
  %v92 = vld [vmem:[%s1 + $0x14] sm:$0xf]
  %v93 = vld [vmem:[%s1 + $0x18] sm:$0xf]
  %v94 = vld [vmem:[%s1 + $0x1c] sm:$0xf]
  %v95 = vld [vmem:[%s1 + $0x20] sm:$0xf]
  %v96 = vld [vmem:[%s1 + $0x24] sm:$0xf]
  %v97 = vld [vmem:[%s1 + $0x28] sm:$0xf]
  %v98 = vld [vmem:[%s1 + $0x2c] sm:$0xf]
  %v99 = vld [vmem:[%s1 + $0x30] sm:$0xf]
  %v100 = vld [vmem:[%s1 + $0x34] sm:$0xf]
  %v101 = vld [vmem:[%s1 + $0x38] sm:$0xf]
  %v102 = vld [vmem:[%s1 + $0x3c] sm:$0xf]
  %v103 = vld [vmem:[%s1 + $0x40] sm:$0xf]
  %v104 = vld [vmem:[%s1 + $0x44] sm:$0xf]
  %v105 = vld [vmem:[#allocation2 + $0x10] sm:$0x11]
  %s106 = scalar_lea.vmem %s1, 72
  %v107 = vld [vmem:[%s106] sm:$0xf]
  %v108 = vld [vmem:[%s106 + $0x4] sm:$0xf]
  %v109 = vld [vmem:[%s106 + $0x8] sm:$0xf]
  %v110 = vld [vmem:[%s106 + $0xc] sm:$0xf]
  %v111 = vld [vmem:[%s106 + $0x10] sm:$0xf]
  %v112 = vld [vmem:[%s106 + $0x14] sm:$0xf]
  %v113 = vld [vmem:[%s106 + $0x18] sm:$0xf]
  %v114 = vld [vmem:[%s106 + $0x1c] sm:$0xf]
  %v115 = vld [vmem:[%s106 + $0x20] sm:$0xf]
  %v116 = vld [vmem:[%s106 + $0x24] sm:$0xf]
  %v117 = vld [vmem:[%s106 + $0x28] sm:$0xf]
  %v118 = vld [vmem:[%s106 + $0x2c] sm:$0xf]
  %v119 = vld [vmem:[%s106 + $0x30] sm:$0xf]
  %v120 = vld [vmem:[%s106 + $0x34] sm:$0xf]
  %v121 = vld [vmem:[%s106 + $0x38] sm:$0xf]
  %v122 = vld [vmem:[%s106 + $0x3c] sm:$0xf]
  %v123 = vld [vmem:[%s106 + $0x40] sm:$0xf]
  %v124 = vld [vmem:[%s106 + $0x44] sm:$0xf]
  %v128 = vunpack.c.l.b16 %v85
  %v129 = vunpack.c.h.b16 %v85
  %v130 = vunpack.c.l.b16 %v86
  %v131 = vunpack.c.h.b16 %v86
  %v132 = vunpack.c.l.b16 %v105
  %v133 = vunpack.c.h.b16 %v105
  %v134 = vpack.c.b16 %v130, %v128
  %v135 = vpack.c.b16 %v131, %v129
  %v136 = vpack.c.b16 %v132, %v132
  %v137 = vpack.c.b16 %v133, %v133
  %vm138 = vsmask.f32 7424
  %v140 = vshrl.u32 %v134, 16
  %v142 = vshll.u32 %v134, 16
  %v144 = vrot.slane %v142, 1
  %v145 = vor.u32 %v140, %v144
  %v147 = vshll.u32 %v136, 16
  %v149 = vrot.slane %v147, 1
  %v150 = vsel %vm138, %v145, %v149
  %v152 = vshrl.u32 %v135, 16
  %v154 = vshll.u32 %v135, 16
  %v156 = vrot.slane %v154, 1
  %v157 = vor.u32 %v152, %v156
  %v159 = vshll.u32 %v137, 16
  %v161 = vrot.slane %v159, 1
  %v162 = vsel %vm138, %v157, %v161
  %v182 = vunpack.c.l.b16 %v107
  %v183 = vunpack.c.l.b16 %v108
  %v184 = vunpack.c.l.b16 %v109
  %v185 = vunpack.c.l.b16 %v110
  %v186 = vunpack.c.l.b16 %v111
  %v187 = vunpack.c.l.b16 %v112
  %v188 = vunpack.c.l.b16 %v113
  %v189 = vunpack.c.l.b16 %v114
  %v190 = vunpack.c.l.b16 %v115
  %v191 = vunpack.c.l.b16 %v116
  %v192 = vunpack.c.l.b16 %v117
  %v193 = vunpack.c.l.b16 %v118
  %v194 = vunpack.c.l.b16 %v119
  %v195 = vunpack.c.l.b16 %v120
  %v196 = vunpack.c.l.b16 %v121
  %v197 = vunpack.c.l.b16 %v122
  %v198 = vunpack.c.l.b16 %v123
  %v199 = vunpack.c.l.b16 %v124
  %v200 = vpack.c.b16 %v183, %v182
  %v201 = vpack.c.b16 %v185, %v184
  %v202 = vpack.c.b16 %v187, %v186
  %v203 = vpack.c.b16 %v189, %v188
  %v204 = vpack.c.b16 %v191, %v190
  %v205 = vpack.c.b16 %v193, %v192
  %v206 = vpack.c.b16 %v195, %v194
  %v207 = vpack.c.b16 %v197, %v196
  %v208 = vpack.c.b16 %v199, %v198
  %vm218 = vcmask 130048
  %v220 = vsel %vm218, %v162, 0
  %222 = vmatprep.subr.bf16.mxu0 0
  %223 = vmatpush1.bf16.msra.mxu0 %v207
  %224 = vmatprep.subr.bf16.mxu0 0
  %225 = vmatpush1.bf16.msra.mxu0 %v206
  %226 = vmatprep.subr.bf16.mxu0 0
  %227 = vmatpush1.bf16.msra.mxu0 %v205
  %228 = vmatprep.subr.bf16.mxu0 0
  %229 = vmatpush1.bf16.msra.mxu0 %v204
  %230 = vmatprep.subr.bf16.mxu0 0
  %231 = vmatpush1.bf16.msra.mxu0 %v203
  %232 = vmatprep.subr.bf16.mxu0 0
  %233 = vmatpush1.bf16.msra.mxu0 %v202
  %234 = vmatprep.subr.bf16.mxu0 0
  %235 = vmatpush1.bf16.msra.mxu0 %v201
  %236 = vmatprep.subr.bf16.mxu0 0
  %237 = vmatpush1.bf16.msra.mxu0 %v200
  %238 = vmatprep.subr.bf16.mxu0 0
  %239 = vmatpush2.bf16.msra.mxu0 0
  %240 = vmatprep.subr.bf16.mxu0 0
  %241 = vmatpush2.bf16.msra.mxu0 0
  %242 = vmatprep.subr.bf16.mxu0 0
  %243 = vmatpush2.bf16.msra.mxu0 0
  %244 = vmatprep.subr.bf16.mxu0 0
  %245 = vmatpush2.bf16.msra.mxu0 0
  %246 = vmatprep.subr.bf16.mxu0 0
  %247 = vmatpush2.bf16.msra.mxu0 0
  %248 = vmatprep.subr.bf16.mxu0 0
  %249 = vmatpush2.bf16.msra.mxu0 0
  %250 = vmatprep.subr.bf16.mxu0 0
  %251 = vmatpush2.bf16.msra.mxu0 0
  %252 = vmatprep.subr.bf16.mxu0 0
  %253 = vmatpush2.bf16.msra.mxu0 %v208
  %254 = vmatprep.mubr.bf16.mxu0 %v220
  %255 = vmatmul.mubr.bf16.gmra.mxu0 %v150
  %v256 = vpop.f32.mrf.mxu0
  %v257 = vadd.f32 0.0, %v256
  %v258 = vpop.f32.mrf.mxu0
  %v259 = vpop.f32.mrf.mxu0
  %v260 = vadd.f32 0.0, %v259
  %v261 = vpop.f32.mrf.mxu0
  %262 = vdwg.mxu0
  %v282 = vunpack.c.l.b16 %v87
  %v283 = vunpack.c.l.b16 %v88
  %v284 = vunpack.c.l.b16 %v89
  %v285 = vunpack.c.l.b16 %v90
  %v286 = vunpack.c.l.b16 %v91
  %v287 = vunpack.c.l.b16 %v92
  %v288 = vunpack.c.l.b16 %v93
  %v289 = vunpack.c.l.b16 %v94
  %v290 = vunpack.c.l.b16 %v95
  %v291 = vunpack.c.l.b16 %v96
  %v292 = vunpack.c.l.b16 %v97
  %v293 = vunpack.c.l.b16 %v98
  %v294 = vunpack.c.l.b16 %v99
  %v295 = vunpack.c.l.b16 %v100
  %v296 = vunpack.c.l.b16 %v101
  %v297 = vunpack.c.l.b16 %v102
  %v298 = vunpack.c.l.b16 %v103
  %v299 = vunpack.c.l.b16 %v104
  %v300 = vpack.c.b16 %v283, %v282
  %v301 = vpack.c.b16 %v285, %v284
  %v302 = vpack.c.b16 %v287, %v286
  %v303 = vpack.c.b16 %v289, %v288
  %v304 = vpack.c.b16 %v291, %v290
  %v305 = vpack.c.b16 %v293, %v292
  %v306 = vpack.c.b16 %v295, %v294
  %v307 = vpack.c.b16 %v297, %v296
  %v308 = vpack.c.b16 %v299, %v298
  %v318 = vsel %vm218, %v135, 0
  %320 = vmatprep.subr.bf16.mxu0 0
  %321 = vmatpush1.bf16.msra.mxu0 %v307
  %322 = vmatprep.subr.bf16.mxu0 0
  %323 = vmatpush1.bf16.msra.mxu0 %v306
  %324 = vmatprep.subr.bf16.mxu0 0
  %325 = vmatpush1.bf16.msra.mxu0 %v305
  %326 = vmatprep.subr.bf16.mxu0 0
  %327 = vmatpush1.bf16.msra.mxu0 %v304
  %328 = vmatprep.subr.bf16.mxu0 0
  %329 = vmatpush1.bf16.msra.mxu0 %v303
  %330 = vmatprep.subr.bf16.mxu0 0
  %331 = vmatpush1.bf16.msra.mxu0 %v302
  %332 = vmatprep.subr.bf16.mxu0 0
  %333 = vmatpush1.bf16.msra.mxu0 %v301
  %334 = vmatprep.subr.bf16.mxu0 0
  %335 = vmatpush1.bf16.msra.mxu0 %v300
  %336 = vmatprep.subr.bf16.mxu0 0
  %337 = vmatpush2.bf16.msra.mxu0 0
  %338 = vmatprep.subr.bf16.mxu0 0
  %339 = vmatpush2.bf16.msra.mxu0 0
  %340 = vmatprep.subr.bf16.mxu0 0
  %341 = vmatpush2.bf16.msra.mxu0 0
  %342 = vmatprep.subr.bf16.mxu0 0
  %343 = vmatpush2.bf16.msra.mxu0 0
  %344 = vmatprep.subr.bf16.mxu0 0
  %345 = vmatpush2.bf16.msra.mxu0 0
  %346 = vmatprep.subr.bf16.mxu0 0
  %347 = vmatpush2.bf16.msra.mxu0 0
  %348 = vmatprep.subr.bf16.mxu0 0
  %349 = vmatpush2.bf16.msra.mxu0 0
  %350 = vmatprep.subr.bf16.mxu0 0
  %351 = vmatpush2.bf16.msra.mxu0 %v308
  %352 = vmatprep.mubr.bf16.mxu0 %v318
  %353 = vmatmul.mubr.bf16.gmra.mxu0 %v134
  %v354 = vpop.f32.mrf.mxu0
  %v355 = vadd.f32 %v257, %v354
  %v356 = vpop.f32.mrf.mxu0
  %v357 = vpop.f32.mrf.mxu0
  %v358 = vadd.f32 %v260, %v357
  %v359 = vpop.f32.mrf.mxu0
  %360 = vdwg.mxu0
  %v361 = vld [vmem:[#allocation2] sm:$0xee]
  %s362 = scalar_lea.vmem %s1, 144
  %v363 = vld [vmem:[%s362] sm:$0xf]
  %v364 = vld [vmem:[%s362 + $0x4] sm:$0xf]
  %v365 = vld [vmem:[%s362 + $0x8] sm:$0xf]
  %v366 = vld [vmem:[%s362 + $0xc] sm:$0xf]
  %v367 = vld [vmem:[%s362 + $0x10] sm:$0xf]
  %v368 = vld [vmem:[%s362 + $0x14] sm:$0xf]
  %v369 = vld [vmem:[%s362 + $0x18] sm:$0xf]
  %v370 = vld [vmem:[%s362 + $0x1c] sm:$0xf]
  %v371 = vld [vmem:[%s362 + $0x20] sm:$0xf]
  %v372 = vld [vmem:[%s362 + $0x24] sm:$0xf]
  %v373 = vld [vmem:[%s362 + $0x28] sm:$0xf]
  %v374 = vld [vmem:[%s362 + $0x2c] sm:$0xf]
  %v375 = vld [vmem:[%s362 + $0x30] sm:$0xf]
  %v376 = vld [vmem:[%s362 + $0x34] sm:$0xf]
  %v377 = vld [vmem:[%s362 + $0x38] sm:$0xf]
  %v378 = vld [vmem:[%s362 + $0x3c] sm:$0xf]
  %v379 = vld [vmem:[%s362 + $0x40] sm:$0xf]
  %v380 = vld [vmem:[%s362 + $0x44] sm:$0xf]
  %v382 = vunpack.c.l.b16 %v361
  %v383 = vunpack.c.h.b16 %v361
  %v384 = vpack.c.b16 %v130, %v382
  %v385 = vpack.c.b16 %v131, %v383
  %vm386 = vcmask 1046528
  %v387 = vrot.slane %v384, 1
  %v388 = vrot.slane %v136, 1
  %v389 = vsel %vm386, %v387, %v388
  %v390 = vrot.slane %v385, 1
  %v391 = vrot.slane %v137, 1
  %v392 = vsel %vm386, %v390, %v391
  %v412 = vunpack.c.l.b16 %v363
  %v413 = vunpack.c.l.b16 %v364
  %v414 = vunpack.c.l.b16 %v365
  %v415 = vunpack.c.l.b16 %v366
  %v416 = vunpack.c.l.b16 %v367
  %v417 = vunpack.c.l.b16 %v368
  %v418 = vunpack.c.l.b16 %v369
  %v419 = vunpack.c.l.b16 %v370
  %v420 = vunpack.c.l.b16 %v371
  %v421 = vunpack.c.l.b16 %v372
  %v422 = vunpack.c.l.b16 %v373
  %v423 = vunpack.c.l.b16 %v374
  %v424 = vunpack.c.l.b16 %v375
  %v425 = vunpack.c.l.b16 %v376
  %v426 = vunpack.c.l.b16 %v377
  %v427 = vunpack.c.l.b16 %v378
  %v428 = vunpack.c.l.b16 %v379
  %v429 = vunpack.c.l.b16 %v380
  %v430 = vpack.c.b16 %v413, %v412
  %v431 = vpack.c.b16 %v415, %v414
  %v432 = vpack.c.b16 %v417, %v416
  %v433 = vpack.c.b16 %v419, %v418
  %v434 = vpack.c.b16 %v421, %v420
  %v435 = vpack.c.b16 %v423, %v422
  %v436 = vpack.c.b16 %v425, %v424
  %v437 = vpack.c.b16 %v427, %v426
  %v438 = vpack.c.b16 %v429, %v428
  %v449 = vsel %vm218, %v392, 0
  %451 = vmatprep.subr.bf16.mxu0 0
  %452 = vmatpush1.bf16.msra.mxu0 %v437
  %453 = vmatprep.subr.bf16.mxu0 0
  %454 = vmatpush1.bf16.msra.mxu0 %v436
  %455 = vmatprep.subr.bf16.mxu0 0
  %456 = vmatpush1.bf16.msra.mxu0 %v435
  %457 = vmatprep.subr.bf16.mxu0 0
  %458 = vmatpush1.bf16.msra.mxu0 %v434
  %459 = vmatprep.subr.bf16.mxu0 0
  %460 = vmatpush1.bf16.msra.mxu0 %v433
  %461 = vmatprep.subr.bf16.mxu0 0
  %462 = vmatpush1.bf16.msra.mxu0 %v432
  %463 = vmatprep.subr.bf16.mxu0 0
  %464 = vmatpush1.bf16.msra.mxu0 %v431
  %465 = vmatprep.subr.bf16.mxu0 0
  %466 = vmatpush1.bf16.msra.mxu0 %v430
  %467 = vmatprep.subr.bf16.mxu0 0
  %468 = vmatpush2.bf16.msra.mxu0 0
  %469 = vmatprep.subr.bf16.mxu0 0
  %470 = vmatpush2.bf16.msra.mxu0 0
  %471 = vmatprep.subr.bf16.mxu0 0
  %472 = vmatpush2.bf16.msra.mxu0 0
  %473 = vmatprep.subr.bf16.mxu0 0
  %474 = vmatpush2.bf16.msra.mxu0 0
  %475 = vmatprep.subr.bf16.mxu0 0
  %476 = vmatpush2.bf16.msra.mxu0 0
  %477 = vmatprep.subr.bf16.mxu0 0
  %478 = vmatpush2.bf16.msra.mxu0 0
  %479 = vmatprep.subr.bf16.mxu0 0
  %480 = vmatpush2.bf16.msra.mxu0 0
  %481 = vmatprep.subr.bf16.mxu0 0
  %482 = vmatpush2.bf16.msra.mxu0 %v438
  %483 = vmatprep.mubr.bf16.mxu0 %v449
  %484 = vmatmul.mubr.bf16.gmra.mxu0 %v389
  %v485 = vpop.f32.mrf.mxu0
  %v486 = vadd.f32 0.0, %v485
  %v487 = vpop.f32.mrf.mxu0
  %v488 = vpop.f32.mrf.mxu0
  %v489 = vadd.f32 0.0, %v488
  %v490 = vpop.f32.mrf.mxu0
  %491 = vdwg.mxu0
  %v492 = vadd.f32 %v355, %v486
  %v493 = vadd.f32 %v358, %v489
  %v494 = vld [vmem:[%s2] sm:$0x1]
  %v496 = vlaneseq
  %v497 = vshrl.u32 %v496, 7
  %v498 = vsub.s32 0, %v497
  %v499 = vrot.slane %v494, %v498
  %v501 = vadd.f32 %v492, %v499
  %v502 = vadd.f32 %v493, %v499
  %v503 = vld [vmem:[%s3] sm:$0x1]
  %v504 = vld [vmem:[%s4] sm:$0x1]
  %v505 = vadd.f32 %v501, %v502
  %v506 = vrot.slane %v505, 4
  %v507 = vadd.f32 %v505, %v506
  %v508 = vrot.slane %v507, 2
  %v509 = vadd.f32 %v507, %v508
  %v510 = vrot.slane %v509, 1
  %v511 = vadd.f32 %v509, %v510
  %512 = vrot.lane.b32.xlu0 %v511, 4
  %v513 = vpop.permute.xlu0 %512
  %v514 = vadd.f32 %v511, %v513
  %515 = vrot.lane.b32.xlu0 %v514, 8
  %v516 = vpop.permute.xlu0 %515
  %v517 = vadd.f32 %v514, %v516
  %518 = vrot.lane.b32.xlu0 %v517, 16
  %v519 = vpop.permute.xlu0 %518
  %v520 = vadd.f32 %v517, %v519
  %521 = vrot.lane.b32.xlu0 %v520, 32
  %v522 = vpop.permute.xlu0 %521
  %v523 = vadd.f32 %v520, %v522
  %524 = vrot.lane.b32.xlu0 %v523, 64
  %v525 = vpop.permute.xlu0 %524
  %v526 = vadd.f32 %v523, %v525
  %v527 = vmul.f32 %v526, 0.001953125
  %v528 = vlaneseq
  %v529 = vshrl.u32 %v528, 7
  %v530 = vsub.s32 0, %v529
  %v531 = vrot.slane %v527, %v530
  %v532 = vsub.f32 %v501, %v531
  %v533 = vsub.f32 %v502, %v531
  %v534 = vmul.f32 %v532, %v532
  %v535 = vmul.f32 %v533, %v533
  %v536 = vadd.f32 %v534, %v535
  %v537 = vrot.slane %v536, 4
  %v538 = vadd.f32 %v536, %v537
  %v539 = vrot.slane %v538, 2
  %v540 = vadd.f32 %v538, %v539
  %v541 = vrot.slane %v540, 1
  %v542 = vadd.f32 %v540, %v541
  %543 = vrot.lane.b32.xlu0 %v542, 4
  %v544 = vpop.permute.xlu0 %543
  %v545 = vadd.f32 %v542, %v544
  %546 = vrot.lane.b32.xlu0 %v545, 8
  %v547 = vpop.permute.xlu0 %546
  %v548 = vadd.f32 %v545, %v547
  %549 = vrot.lane.b32.xlu0 %v548, 16
  %v550 = vpop.permute.xlu0 %549
  %v551 = vadd.f32 %v548, %v550
  %552 = vrot.lane.b32.xlu0 %v551, 32
  %v553 = vpop.permute.xlu0 %552
  %v554 = vadd.f32 %v551, %v553
  %555 = vrot.lane.b32.xlu0 %v554, 64
  %v556 = vpop.permute.xlu0 %555
  %v557 = vadd.f32 %v554, %v556
  %v558 = vmul.f32 %v557, 0.001953125
  %v559 = vadd.f32 %v558, 1e-05
  %v560 = vrsqrt.pop %v559
  %v561 = vmul.f32 %v503, %v560
  %v563 = vlaneseq
  %v564 = vshrl.u32 %v563, 7
  %v565 = vsub.s32 0, %v564
  %v566 = vrot.slane %v561, %v565
  %v568 = vmul.f32 %v532, %v566
  %v569 = vmul.f32 %v533, %v566
  %v571 = vlaneseq
  %v572 = vshrl.u32 %v571, 7
  %v573 = vsub.s32 0, %v572
  %v574 = vrot.slane %v504, %v573
  %v576 = vadd.f32 %v568, %v574
  %v577 = vadd.f32 %v569, %v574
  %vm578 = vcmp.ge.f32.partialorder %v576, 0.0
  %vm579 = vcmp.ge.f32.partialorder %v577, 0.0
  %v580 = vmul.f32 %v576, 0.01
  %v581 = vmul.f32 %v577, 0.01
  %v582 = vsel %vm578, %v576, %v580
  %v583 = vsel %vm579, %v577, %v581
  %v584 = vpack.c.bf16 %v583, %v582
  %v586 = vunpack.c.l.b16 %v584
  %v587 = vunpack.c.h.b16 %v584
  %v588 = vpack.c.b16 %v586, %v586
  %v589 = vpack.c.b16 %v587, %v587
  %v591 = vshrl.u32 %v588, 16
  %v593 = vrot.slane %v591, 7
  %v594 = vshll.u32 %v588, 16
  %v596 = vor.u32 %v593, %v594
  %v597 = vrot.slane %v593, 4
  %v599 = vshrl.u32 %v589, 16
  %v601 = vrot.slane %v599, 7
  %v602 = vshll.u32 %v589, 16
  %v604 = vor.u32 %v601, %v602
  %v605 = vsel %vm52, %v597, %v604
  %v606 = vrot.slane %v601, 4
  %v610 = vld [vmem:[#allocation2] sm:$0xf]
  %v611 = vsel %vm75, %v596, %v610
  %612 = vst [vmem:[#allocation2] sm:$0xf] %v611
  %613 = vst [vmem:[#allocation2 + $0x8] sm:$0xf] %v605
  %v614 = vld [vmem:[#allocation2 + $0x10] sm:$0x1]
  %v615 = vsel %vm81, %v606, %v614
  %616 = vst [vmem:[#allocation2 + $0x10] sm:$0x1] %v615
  %v617 = vld [vmem:[#allocation2] sm:$0xff]
  %v618 = vld [vmem:[#allocation2 + $0x8] sm:$0xff]
  %v619 = vld [vmem:[%s5] sm:$0xf]
  %v620 = vld [vmem:[%s5 + $0x4] sm:$0xf]
  %v621 = vld [vmem:[%s5 + $0x8] sm:$0xf]
  %v622 = vld [vmem:[%s5 + $0xc] sm:$0xf]
  %v623 = vld [vmem:[%s5 + $0x10] sm:$0xf]
  %v624 = vld [vmem:[%s5 + $0x14] sm:$0xf]
  %v625 = vld [vmem:[%s5 + $0x18] sm:$0xf]
  %v626 = vld [vmem:[%s5 + $0x1c] sm:$0xf]
  %v627 = vld [vmem:[%s5 + $0x20] sm:$0xf]
  %v628 = vld [vmem:[%s5 + $0x24] sm:$0xf]
  %v629 = vld [vmem:[%s5 + $0x28] sm:$0xf]
  %v630 = vld [vmem:[%s5 + $0x2c] sm:$0xf]
  %v631 = vld [vmem:[%s5 + $0x30] sm:$0xf]
  %v632 = vld [vmem:[%s5 + $0x34] sm:$0xf]
  %v633 = vld [vmem:[%s5 + $0x38] sm:$0xf]
  %v634 = vld [vmem:[%s5 + $0x3c] sm:$0xf]
  %v635 = vld [vmem:[%s5 + $0x40] sm:$0xf]
  %v636 = vld [vmem:[%s5 + $0x44] sm:$0xf]
  %v637 = vld [vmem:[#allocation2 + $0x10] sm:$0x11]
  %s638 = scalar_lea.vmem %s5, 72
  %v639 = vld [vmem:[%s638] sm:$0xf]
  %v640 = vld [vmem:[%s638 + $0x4] sm:$0xf]
  %v641 = vld [vmem:[%s638 + $0x8] sm:$0xf]
  %v642 = vld [vmem:[%s638 + $0xc] sm:$0xf]
  %v643 = vld [vmem:[%s638 + $0x10] sm:$0xf]
  %v644 = vld [vmem:[%s638 + $0x14] sm:$0xf]
  %v645 = vld [vmem:[%s638 + $0x18] sm:$0xf]
  %v646 = vld [vmem:[%s638 + $0x1c] sm:$0xf]
  %v647 = vld [vmem:[%s638 + $0x20] sm:$0xf]
  %v648 = vld [vmem:[%s638 + $0x24] sm:$0xf]
  %v649 = vld [vmem:[%s638 + $0x28] sm:$0xf]
  %v650 = vld [vmem:[%s638 + $0x2c] sm:$0xf]
  %v651 = vld [vmem:[%s638 + $0x30] sm:$0xf]
  %v652 = vld [vmem:[%s638 + $0x34] sm:$0xf]
  %v653 = vld [vmem:[%s638 + $0x38] sm:$0xf]
  %v654 = vld [vmem:[%s638 + $0x3c] sm:$0xf]
  %v655 = vld [vmem:[%s638 + $0x40] sm:$0xf]
  %v656 = vld [vmem:[%s638 + $0x44] sm:$0xf]
  %v660 = vunpack.c.l.b16 %v617
  %v661 = vunpack.c.h.b16 %v617
  %v662 = vunpack.c.l.b16 %v618
  %v663 = vunpack.c.h.b16 %v618
  %v664 = vunpack.c.l.b16 %v637
  %v665 = vunpack.c.h.b16 %v637
  %v666 = vpack.c.b16 %v662, %v660
  %v667 = vpack.c.b16 %v663, %v661
  %v668 = vpack.c.b16 %v664, %v664
  %v669 = vpack.c.b16 %v665, %v665
  %v671 = vshrl.u32 %v666, 16
  %v673 = vshll.u32 %v666, 16
  %v675 = vrot.slane %v673, 1
  %v676 = vor.u32 %v671, %v675
  %v678 = vshll.u32 %v668, 16
  %v680 = vrot.slane %v678, 1
  %v681 = vsel %vm138, %v676, %v680
  %v683 = vshrl.u32 %v667, 16
  %v685 = vshll.u32 %v667, 16
  %v687 = vrot.slane %v685, 1
  %v688 = vor.u32 %v683, %v687
  %v690 = vshll.u32 %v669, 16
  %v692 = vrot.slane %v690, 1
  %v693 = vsel %vm138, %v688, %v692
  %v713 = vunpack.c.l.b16 %v639
  %v714 = vunpack.c.l.b16 %v640
  %v715 = vunpack.c.l.b16 %v641
  %v716 = vunpack.c.l.b16 %v642
  %v717 = vunpack.c.l.b16 %v643
  %v718 = vunpack.c.l.b16 %v644
  %v719 = vunpack.c.l.b16 %v645
  %v720 = vunpack.c.l.b16 %v646
  %v721 = vunpack.c.l.b16 %v647
  %v722 = vunpack.c.l.b16 %v648
  %v723 = vunpack.c.l.b16 %v649
  %v724 = vunpack.c.l.b16 %v650
  %v725 = vunpack.c.l.b16 %v651
  %v726 = vunpack.c.l.b16 %v652
  %v727 = vunpack.c.l.b16 %v653
  %v728 = vunpack.c.l.b16 %v654
  %v729 = vunpack.c.l.b16 %v655
  %v730 = vunpack.c.l.b16 %v656
  %v731 = vpack.c.b16 %v714, %v713
  %v732 = vpack.c.b16 %v716, %v715
  %v733 = vpack.c.b16 %v718, %v717
  %v734 = vpack.c.b16 %v720, %v719
  %v735 = vpack.c.b16 %v722, %v721
  %v736 = vpack.c.b16 %v724, %v723
  %v737 = vpack.c.b16 %v726, %v725
  %v738 = vpack.c.b16 %v728, %v727
  %v739 = vpack.c.b16 %v730, %v729
  %v750 = vsel %vm218, %v693, 0
  %752 = vmatprep.subr.bf16.mxu0 0
  %753 = vmatpush1.bf16.msra.mxu0 %v738
  %754 = vmatprep.subr.bf16.mxu0 0
  %755 = vmatpush1.bf16.msra.mxu0 %v737
  %756 = vmatprep.subr.bf16.mxu0 0
  %757 = vmatpush1.bf16.msra.mxu0 %v736
  %758 = vmatprep.subr.bf16.mxu0 0
  %759 = vmatpush1.bf16.msra.mxu0 %v735
  %760 = vmatprep.subr.bf16.mxu0 0
  %761 = vmatpush1.bf16.msra.mxu0 %v734
  %762 = vmatprep.subr.bf16.mxu0 0
  %763 = vmatpush1.bf16.msra.mxu0 %v733
  %764 = vmatprep.subr.bf16.mxu0 0
  %765 = vmatpush1.bf16.msra.mxu0 %v732
  %766 = vmatprep.subr.bf16.mxu0 0
  %767 = vmatpush1.bf16.msra.mxu0 %v731
  %768 = vmatprep.subr.bf16.mxu0 0
  %769 = vmatpush2.bf16.msra.mxu0 0
  %770 = vmatprep.subr.bf16.mxu0 0
  %771 = vmatpush2.bf16.msra.mxu0 0
  %772 = vmatprep.subr.bf16.mxu0 0
  %773 = vmatpush2.bf16.msra.mxu0 0
  %774 = vmatprep.subr.bf16.mxu0 0
  %775 = vmatpush2.bf16.msra.mxu0 0
  %776 = vmatprep.subr.bf16.mxu0 0
  %777 = vmatpush2.bf16.msra.mxu0 0
  %778 = vmatprep.subr.bf16.mxu0 0
  %779 = vmatpush2.bf16.msra.mxu0 0
  %780 = vmatprep.subr.bf16.mxu0 0
  %781 = vmatpush2.bf16.msra.mxu0 0
  %782 = vmatprep.subr.bf16.mxu0 0
  %783 = vmatpush2.bf16.msra.mxu0 %v739
  %784 = vmatprep.mubr.bf16.mxu0 %v750
  %785 = vmatmul.mubr.bf16.gmra.mxu0 %v681
  %v786 = vpop.f32.mrf.mxu0
  %v787 = vadd.f32 0.0, %v786
  %v788 = vpop.f32.mrf.mxu0
  %v789 = vpop.f32.mrf.mxu0
  %v790 = vadd.f32 0.0, %v789
  %v791 = vpop.f32.mrf.mxu0
  %792 = vdwg.mxu0
  %v812 = vunpack.c.l.b16 %v619
  %v813 = vunpack.c.l.b16 %v620
  %v814 = vunpack.c.l.b16 %v621
  %v815 = vunpack.c.l.b16 %v622
  %v816 = vunpack.c.l.b16 %v623
  %v817 = vunpack.c.l.b16 %v624
  %v818 = vunpack.c.l.b16 %v625
  %v819 = vunpack.c.l.b16 %v626
  %v820 = vunpack.c.l.b16 %v627
  %v821 = vunpack.c.l.b16 %v628
  %v822 = vunpack.c.l.b16 %v629
  %v823 = vunpack.c.l.b16 %v630
  %v824 = vunpack.c.l.b16 %v631
  %v825 = vunpack.c.l.b16 %v632
  %v826 = vunpack.c.l.b16 %v633
  %v827 = vunpack.c.l.b16 %v634
  %v828 = vunpack.c.l.b16 %v635
  %v829 = vunpack.c.l.b16 %v636
  %v830 = vpack.c.b16 %v813, %v812
  %v831 = vpack.c.b16 %v815, %v814
  %v832 = vpack.c.b16 %v817, %v816
  %v833 = vpack.c.b16 %v819, %v818
  %v834 = vpack.c.b16 %v821, %v820
  %v835 = vpack.c.b16 %v823, %v822
  %v836 = vpack.c.b16 %v825, %v824
  %v837 = vpack.c.b16 %v827, %v826
  %v838 = vpack.c.b16 %v829, %v828
  %v848 = vsel %vm218, %v667, 0
  %850 = vmatprep.subr.bf16.mxu0 0
  %851 = vmatpush1.bf16.msra.mxu0 %v837
  %852 = vmatprep.subr.bf16.mxu0 0
  %853 = vmatpush1.bf16.msra.mxu0 %v836
  %854 = vmatprep.subr.bf16.mxu0 0
  %855 = vmatpush1.bf16.msra.mxu0 %v835
  %856 = vmatprep.subr.bf16.mxu0 0
  %857 = vmatpush1.bf16.msra.mxu0 %v834
  %858 = vmatprep.subr.bf16.mxu0 0
  %859 = vmatpush1.bf16.msra.mxu0 %v833
  %860 = vmatprep.subr.bf16.mxu0 0
  %861 = vmatpush1.bf16.msra.mxu0 %v832
  %862 = vmatprep.subr.bf16.mxu0 0
  %863 = vmatpush1.bf16.msra.mxu0 %v831
  %864 = vmatprep.subr.bf16.mxu0 0
  %865 = vmatpush1.bf16.msra.mxu0 %v830
  %866 = vmatprep.subr.bf16.mxu0 0
  %867 = vmatpush2.bf16.msra.mxu0 0
  %868 = vmatprep.subr.bf16.mxu0 0
  %869 = vmatpush2.bf16.msra.mxu0 0
  %870 = vmatprep.subr.bf16.mxu0 0
  %871 = vmatpush2.bf16.msra.mxu0 0
  %872 = vmatprep.subr.bf16.mxu0 0
  %873 = vmatpush2.bf16.msra.mxu0 0
  %874 = vmatprep.subr.bf16.mxu0 0
  %875 = vmatpush2.bf16.msra.mxu0 0
  %876 = vmatprep.subr.bf16.mxu0 0
  %877 = vmatpush2.bf16.msra.mxu0 0
  %878 = vmatprep.subr.bf16.mxu0 0
  %879 = vmatpush2.bf16.msra.mxu0 0
  %880 = vmatprep.subr.bf16.mxu0 0
  %881 = vmatpush2.bf16.msra.mxu0 %v838
  %882 = vmatprep.mubr.bf16.mxu0 %v848
  %883 = vmatmul.mubr.bf16.gmra.mxu0 %v666
  %v884 = vpop.f32.mrf.mxu0
  %v885 = vadd.f32 %v787, %v884
  %v886 = vpop.f32.mrf.mxu0
  %v887 = vpop.f32.mrf.mxu0
  %v888 = vadd.f32 %v790, %v887
  %v889 = vpop.f32.mrf.mxu0
  %890 = vdwg.mxu0
  %v891 = vld [vmem:[#allocation2] sm:$0xee]
  %s892 = scalar_lea.vmem %s5, 144
  %v893 = vld [vmem:[%s892] sm:$0xf]
  %v894 = vld [vmem:[%s892 + $0x4] sm:$0xf]
  %v895 = vld [vmem:[%s892 + $0x8] sm:$0xf]
  %v896 = vld [vmem:[%s892 + $0xc] sm:$0xf]
  %v897 = vld [vmem:[%s892 + $0x10] sm:$0xf]
  %v898 = vld [vmem:[%s892 + $0x14] sm:$0xf]
  %v899 = vld [vmem:[%s892 + $0x18] sm:$0xf]
  %v900 = vld [vmem:[%s892 + $0x1c] sm:$0xf]
  %v901 = vld [vmem:[%s892 + $0x20] sm:$0xf]
  %v902 = vld [vmem:[%s892 + $0x24] sm:$0xf]
  %v903 = vld [vmem:[%s892 + $0x28] sm:$0xf]
  %v904 = vld [vmem:[%s892 + $0x2c] sm:$0xf]
  %v905 = vld [vmem:[%s892 + $0x30] sm:$0xf]
  %v906 = vld [vmem:[%s892 + $0x34] sm:$0xf]
  %v907 = vld [vmem:[%s892 + $0x38] sm:$0xf]
  %v908 = vld [vmem:[%s892 + $0x3c] sm:$0xf]
  %v909 = vld [vmem:[%s892 + $0x40] sm:$0xf]
  %v910 = vld [vmem:[%s892 + $0x44] sm:$0xf]
  %v912 = vunpack.c.l.b16 %v891
  %v913 = vunpack.c.h.b16 %v891
  %v914 = vpack.c.b16 %v662, %v912
  %v915 = vpack.c.b16 %v663, %v913
  %v916 = vrot.slane %v914, 1
  %v917 = vrot.slane %v668, 1
  %v918 = vsel %vm386, %v916, %v917
  %v919 = vrot.slane %v915, 1
  %v920 = vrot.slane %v669, 1
  %v921 = vsel %vm386, %v919, %v920
  %v941 = vunpack.c.l.b16 %v893
  %v942 = vunpack.c.l.b16 %v894
  %v943 = vunpack.c.l.b16 %v895
  %v944 = vunpack.c.l.b16 %v896
  %v945 = vunpack.c.l.b16 %v897
  %v946 = vunpack.c.l.b16 %v898
  %v947 = vunpack.c.l.b16 %v899
  %v948 = vunpack.c.l.b16 %v900
  %v949 = vunpack.c.l.b16 %v901
  %v950 = vunpack.c.l.b16 %v902
  %v951 = vunpack.c.l.b16 %v903
  %v952 = vunpack.c.l.b16 %v904
  %v953 = vunpack.c.l.b16 %v905
  %v954 = vunpack.c.l.b16 %v906
  %v955 = vunpack.c.l.b16 %v907
  %v956 = vunpack.c.l.b16 %v908
  %v957 = vunpack.c.l.b16 %v909
  %v958 = vunpack.c.l.b16 %v910
  %v959 = vpack.c.b16 %v942, %v941
  %v960 = vpack.c.b16 %v944, %v943
  %v961 = vpack.c.b16 %v946, %v945
  %v962 = vpack.c.b16 %v948, %v947
  %v963 = vpack.c.b16 %v950, %v949
  %v964 = vpack.c.b16 %v952, %v951
  %v965 = vpack.c.b16 %v954, %v953
  %v966 = vpack.c.b16 %v956, %v955
  %v967 = vpack.c.b16 %v958, %v957
  %v978 = vsel %vm218, %v921, 0
  %980 = vmatprep.subr.bf16.mxu0 0
  %981 = vmatpush1.bf16.msra.mxu0 %v966
  %982 = vmatprep.subr.bf16.mxu0 0
  %983 = vmatpush1.bf16.msra.mxu0 %v965
  %984 = vmatprep.subr.bf16.mxu0 0
  %985 = vmatpush1.bf16.msra.mxu0 %v964
  %986 = vmatprep.subr.bf16.mxu0 0
  %987 = vmatpush1.bf16.msra.mxu0 %v963
  %988 = vmatprep.subr.bf16.mxu0 0
  %989 = vmatpush1.bf16.msra.mxu0 %v962
  %990 = vmatprep.subr.bf16.mxu0 0
  %991 = vmatpush1.bf16.msra.mxu0 %v961
  %992 = vmatprep.subr.bf16.mxu0 0
  %993 = vmatpush1.bf16.msra.mxu0 %v960
  %994 = vmatprep.subr.bf16.mxu0 0
  %995 = vmatpush1.bf16.msra.mxu0 %v959
  %996 = vmatprep.subr.bf16.mxu0 0
  %997 = vmatpush2.bf16.msra.mxu0 0
  %998 = vmatprep.subr.bf16.mxu0 0
  %999 = vmatpush2.bf16.msra.mxu0 0
  %1000 = vmatprep.subr.bf16.mxu0 0
  %1001 = vmatpush2.bf16.msra.mxu0 0
  %1002 = vmatprep.subr.bf16.mxu0 0
  %1003 = vmatpush2.bf16.msra.mxu0 0
  %1004 = vmatprep.subr.bf16.mxu0 0
  %1005 = vmatpush2.bf16.msra.mxu0 0
  %1006 = vmatprep.subr.bf16.mxu0 0
  %1007 = vmatpush2.bf16.msra.mxu0 0
  %1008 = vmatprep.subr.bf16.mxu0 0
  %1009 = vmatpush2.bf16.msra.mxu0 0
  %1010 = vmatprep.subr.bf16.mxu0 0
  %1011 = vmatpush2.bf16.msra.mxu0 %v967
  %1012 = vmatprep.mubr.bf16.mxu0 %v978
  %1013 = vmatmul.mubr.bf16.gmra.mxu0 %v918
  %v1014 = vpop.f32.mrf.mxu0
  %v1015 = vadd.f32 0.0, %v1014
  %v1016 = vpop.f32.mrf.mxu0
  %v1017 = vpop.f32.mrf.mxu0
  %v1018 = vadd.f32 0.0, %v1017
  %v1019 = vpop.f32.mrf.mxu0
  %1020 = vdwg.mxu0
  %v1021 = vadd.f32 %v885, %v1015
  %v1022 = vadd.f32 %v888, %v1018
  %v1023 = vld [vmem:[%s6] sm:$0x1]
  %v1025 = vlaneseq
  %v1026 = vshrl.u32 %v1025, 7
  %v1027 = vsub.s32 0, %v1026
  %v1028 = vrot.slane %v1023, %v1027
  %v1030 = vadd.f32 %v1021, %v1028
  %v1031 = vadd.f32 %v1022, %v1028
  %v1032 = vld [vmem:[%s7] sm:$0x1]
  %v1033 = vld [vmem:[%s8] sm:$0x1]
  %v1034 = vadd.f32 %v1030, %v1031
  %v1035 = vrot.slane %v1034, 4
  %v1036 = vadd.f32 %v1034, %v1035
  %v1037 = vrot.slane %v1036, 2
  %v1038 = vadd.f32 %v1036, %v1037
  %v1039 = vrot.slane %v1038, 1
  %v1040 = vadd.f32 %v1038, %v1039
  %1041 = vrot.lane.b32.xlu0 %v1040, 4
  %v1042 = vpop.permute.xlu0 %1041
  %v1043 = vadd.f32 %v1040, %v1042
  %1044 = vrot.lane.b32.xlu0 %v1043, 8
  %v1045 = vpop.permute.xlu0 %1044
  %v1046 = vadd.f32 %v1043, %v1045
  %1047 = vrot.lane.b32.xlu0 %v1046, 16
  %v1048 = vpop.permute.xlu0 %1047
  %v1049 = vadd.f32 %v1046, %v1048
  %1050 = vrot.lane.b32.xlu0 %v1049, 32
  %v1051 = vpop.permute.xlu0 %1050
  %v1052 = vadd.f32 %v1049, %v1051
  %1053 = vrot.lane.b32.xlu0 %v1052, 64
  %v1054 = vpop.permute.xlu0 %1053
  %v1055 = vadd.f32 %v1052, %v1054
  %v1056 = vmul.f32 %v1055, 0.001953125
  %v1057 = vlaneseq
  %v1058 = vshrl.u32 %v1057, 7
  %v1059 = vsub.s32 0, %v1058
  %v1060 = vrot.slane %v1056, %v1059
  %v1061 = vsub.f32 %v1030, %v1060
  %v1062 = vsub.f32 %v1031, %v1060
  %v1063 = vmul.f32 %v1061, %v1061
  %v1064 = vmul.f32 %v1062, %v1062
  %v1065 = vadd.f32 %v1063, %v1064
  %v1066 = vrot.slane %v1065, 4
  %v1067 = vadd.f32 %v1065, %v1066
  %v1068 = vrot.slane %v1067, 2
  %v1069 = vadd.f32 %v1067, %v1068
  %v1070 = vrot.slane %v1069, 1
  %v1071 = vadd.f32 %v1069, %v1070
  %1072 = vrot.lane.b32.xlu0 %v1071, 4
  %v1073 = vpop.permute.xlu0 %1072
  %v1074 = vadd.f32 %v1071, %v1073
  %1075 = vrot.lane.b32.xlu0 %v1074, 8
  %v1076 = vpop.permute.xlu0 %1075
  %v1077 = vadd.f32 %v1074, %v1076
  %1078 = vrot.lane.b32.xlu0 %v1077, 16
  %v1079 = vpop.permute.xlu0 %1078
  %v1080 = vadd.f32 %v1077, %v1079
  %1081 = vrot.lane.b32.xlu0 %v1080, 32
  %v1082 = vpop.permute.xlu0 %1081
  %v1083 = vadd.f32 %v1080, %v1082
  %1084 = vrot.lane.b32.xlu0 %v1083, 64
  %v1085 = vpop.permute.xlu0 %1084
  %v1086 = vadd.f32 %v1083, %v1085
  %v1087 = vmul.f32 %v1086, 0.001953125
  %v1088 = vadd.f32 %v1087, 1e-05
  %v1089 = vrsqrt.pop %v1088
  %v1090 = vmul.f32 %v1032, %v1089
  %v1092 = vlaneseq
  %v1093 = vshrl.u32 %v1092, 7
  %v1094 = vsub.s32 0, %v1093
  %v1095 = vrot.slane %v1090, %v1094
  %v1097 = vmul.f32 %v1061, %v1095
  %v1098 = vmul.f32 %v1062, %v1095
  %v1100 = vlaneseq
  %v1101 = vshrl.u32 %v1100, 7
  %v1102 = vsub.s32 0, %v1101
  %v1103 = vrot.slane %v1033, %v1102
  %v1105 = vadd.f32 %v1097, %v1103
  %v1106 = vadd.f32 %v1098, %v1103
  %v1107 = vadd.f32 %v1105, %v42
  %v1108 = vadd.f32 %v1106, %v43
  %vm1109 = vcmp.ge.f32.partialorder %v1107, 0.0
  %vm1110 = vcmp.ge.f32.partialorder %v1108, 0.0
  %v1111 = vmul.f32 %v1107, 0.01
  %v1112 = vmul.f32 %v1108, 0.01
  %v1113 = vsel %vm1109, %v1107, %v1111
  %v1114 = vsel %vm1110, %v1108, %v1112
  %1115 = vst [vmem:[%s9] sm:$0xff] %v1113
  %1116 = vst [vmem:[%s9 + $0x8] sm:$0xff] %v1114
  // Predicated region
  $region38: #{conv_block_forward.1} parent=0 // pred_check
    _
  $region39: #{conv_block_forward.1} parent=0 // pred_check_branch
    %1118 = sbr.rel (0) target = $region41
  $region40: #{conv_block_forward.1} parent=0 // pred_region
    _
  $region41: #{conv_block_forward.1} parent=0 // pred_fallthru
    _
  // Predicated region
  $region42: #{conv_block_forward.1} parent=0 // pred_check
    _
  $region43: #{conv_block_forward.1} parent=0 // pred_check_branch
    %1120 = sbr.rel (0) target = $region45
  $region44: #{conv_block_forward.1} parent=0 // pred_region
    _
  $region45: #{conv_block_forward.1} parent=0 // pred_fallthru
    _

</llo_original>
